<compile_context>
chip_gen: v7x
topology: tpu7x:2x2x1
jax: 0.10.0
libtpu: 0.0.40
codegen_flags: <defaults>
</compile_context>

<pallas_src>
import jax
import jax.numpy as jnp
import numpy as np
from jax.experimental import pallas as pl
from jax.experimental.pallas import tpu as pltpu


SCHED_W = 8  # scalars per (k, p): [c0, c1, c0*deg, c2, c2*deg, c_last, c3, c4]


# ---------------------------------------------------------------------------
# Fused kernel: full D-ADMM iteration loop, state resident in VMEM.
# ---------------------------------------------------------------------------
def _make_fused_kernel(neighbors, color_partition, n_iters, n_nodes, tb):
    """neighbors / color_partition are static Python structures baked in."""

    def kernel(scal_ref,              # SMEM (K*P*8,)  folded |hyp| schedule
               x_ref,                 # VMEM (P, TB, Np)  inputs (batch tile)
               y_ref,                 # VMEM (P, TB, 1)   labels
               w0_ref,                # VMEM (P, TB, 1)   omega init
               a0_hbm,                # ANY  (P, Bp, Np)  a init (stays in HBM)
               a_ref,                 # out  (P, TB, Np)  -- doubles as state
               w_ref,                 # out  (P, TB, 1)   -- doubles as state
               mu_ref,                # scratch (P, TB, Np)
               lam_ref):              # scratch (P, TB, 1)
        # --- init resident per-tile state ---
        off = pl.multiple_of(pl.program_id(0) * tb, tb)
        # a_init never occupies a resident VMEM input buffer: DMA its batch
        # slice straight from HBM into the output block.
        pltpu.sync_copy(a0_hbm.at[:, pl.ds(off, tb), :], a_ref)
        w_ref[...] = w0_ref[...]
        mu_ref[...] = jnp.zeros(mu_ref.shape, mu_ref.dtype)
        lam_ref[...] = jnp.zeros(lam_ref.shape, lam_ref.dtype)

        def nsum_a(p):
            nbrs = neighbors[p]
            if not nbrs:
                return jnp.zeros(a_ref.shape[1:], a_ref.dtype)
            s = a_ref[nbrs[0]]
            for j in nbrs[1:]:
                s = s + a_ref[j]
            return s

        def nsum_w(p):
            nbrs = neighbors[p]
            if not nbrs:
                return jnp.zeros(w_ref.shape[1:], w_ref.dtype)
            s = w_ref[nbrs[0]]
            for j in nbrs[1:]:
                s = s + w_ref[j]
            return s

        @pl.loop(0, n_iters)
        def _(k):
            kbase = k * (n_nodes * SCHED_W)

            # ---- primal: Gauss-Seidel sweep over proper-coloring classes ----
            for color_nodes in color_partition:
                for p in color_nodes:
                    base = kbase + p * SCHED_W
                    c0 = scal_ref[base + 0]      # |hyp[k][p][0]|
                    c1 = scal_ref[base + 1]      # |hyp[k][p][1]|
                    ca = scal_ref[base + 2]      # c0 * deg(p)   (host-folded)
                    c2 = scal_ref[base + 3]      # |hyp[k][p][2]|
                    cw = scal_ref[base + 4]      # c2 * deg(p)   (host-folded)
                    cl = scal_ref[base + 5]      # |hyp[k][p][-1]|
                    dp = float(len(neighbors[p]))

                    x = x_ref[p]                 # (TB, Np)
                    a = a_ref[p]
                    w = w_ref[p]                 # (TB, 1)
                    y = y_ref[p]

                    # Shared residual r = x.a + w - y  (cheap (TB,1) ops),
                    # reused by grad_alpha (as x*r) and grad_omega.
                    xa = jnp.sum(x * a, axis=1, keepdims=True)   # (TB, 1)
                    r = xa + w - y
                    sa = nsum_a(p)
                    sw = nsum_w(p)

                    grad_a = x * r + ca * a + dp * mu_ref[p] - c0 * sa
                    grad_w = r + cw * w + dp * lam_ref[p] - c2 * sw

                    # Immediate commit: proper coloring guarantees no
                    # same-color node reads p's state (matches torch's
                    # a_aux/omega_aux semantics).
                    a_ref[p] = a - c1 * grad_a
                    w_ref[p] = w - cl * grad_w

            # ---- dual updates (mu, lambda) for every node ----
            # TODO(synk): vectorize across the node axis for large P; left as a
            #             per-node loop (negligible for small P).
            for p in range(n_nodes):
                base = kbase + p * SCHED_W
                c3 = scal_ref[base + 6]          # |hyp[k][p][3]|
                c4 = scal_ref[base + 7]          # |hyp[k][p][4]|
                dp = float(len(neighbors[p]))
                mu_ref[p] = mu_ref[p] + c3 * (dp * a_ref[p] - nsum_a(p))
                lam_ref[p] = lam_ref[p] + c4 * (dp * w_ref[p] - nsum_w(p))

    return kernel


# ---------------------------------------------------------------------------
# Forward pass (test=False path of DADMMLRDiff.forward).
# ---------------------------------------------------------------------------
def dadmm_lr_diff_forward(hyp, no_hyp, ll, inputs, labels, neighbors,
                          color_partition, max_iter, a_init, omega_init):
    P, B, N = inputs.shape
    K = max_iter + ll
    f32 = jnp.float32

    # TODO(synk): torch resizes args.batch_size to m_p + m % P at k+1 == MAX_ITER;
    #             shapes are static here, so this assumes m % P == 0.
    # TODO(synk): test=True path (test_set loss/accuracy bookkeeping) not ported.
    # TODO(synk): torch's in-loop debug print / gc.collect are omitted.

    # Pad feature dim to a lane multiple of 128 (exact: padded lanes stay zero).
    Np = max(128, -(-N // 128) * 128)
    padN = Np - N

    # ---- generation-aware VMEM budget & batch tile size -------------------
    try:
        vmem_cap = int(pltpu.get_tpu_info().vmem_capacity_bytes)
    except Exception:
        vmem_cap = 64 * 2 ** 20          # conservative: v7x per-core VMEM
    budget = int(0.70 * vmem_cap)        # leave headroom for compiler scratch

    # Resident tiles per grid step (double-buffered pipelined in/out specs):
    #   big (Np-wide):  x(2) + a_out(2) + mu(1) = 5
    #   small (lane-padded to 128): y(2) + w0(2) + w_out(2) + lam(1) = 7
    bytes_per_row = (5 * Np + 7 * 128) * P * 4
    B8 = -(-B // 8) * 8
    tb_cap = max(8, (budget // max(bytes_per_row, 1)) // 8 * 8)
    # Prefer >=2 grid steps when the batch allows it (v7x megacore split).
    tb_par = B8 if B8 < 16 else max(8, (B8 // 2) // 8 * 8)
    TB = int(min(tb_cap, tb_par, B8))
    B_pad = -(-B // TB) * TB
    padB = B_pad - B

    est = bytes_per_row * TB
    vmem_limit = int(min(0.90 * vmem_cap, max(1.25 * est + (4 << 20), 16 << 20)))

    # ---- pad inputs (padded lanes/rows stay exactly zero through updates) --
    x = inputs.astype(f32)
    a0 = a_init.astype(f32)
    y = labels.astype(f32)
    w0 = omega_init.astype(f32)
    if padN or padB:
        x = jnp.pad(x, ((0, 0), (0, padB), (0, padN)))
        a0 = jnp.pad(a0, ((0, 0), (0, padB), (0, padN)))
        y = jnp.pad(y, ((0, 0), (0, padB), (0, 0)))
        w0 = jnp.pad(w0, ((0, 0), (0, padB), (0, 0)))

    # ---- |hyp| schedule (torch: no_hyp for k < ll, hyp[k-ll] afterwards) ---
    # Host-folded per node as [c0, c1, c0*deg, c2, c2*deg, c_last, c3, c4].
    hyp_abs = jnp.abs(jnp.asarray(hyp)[:max_iter]).astype(f32)
    if ll > 0:
        hk = jnp.concatenate(
            [jnp.abs(jnp.asarray(no_hyp)[:ll]).astype(f32), hyp_abs], 0)
    else:
        hk = hyp_abs                                            # (K, P, H)
    deg = jnp.asarray(np.array([len(nb) for nb in neighbors], np.float32))[None, :]
    scal = jnp.stack([hk[..., 0],                # c0
                      hk[..., 1],                # c1
                      hk[..., 0] * deg,          # c0*deg
                      hk[..., 2],                # c2
                      hk[..., 2] * deg,          # c2*deg
                      hk[..., -1],               # c_last
                      hk[..., 3],                # c3
                      hk[..., 4]], axis=-1)      # c4  -> (K, P, 8)
    # Kept 1-D (2-D SMEM pads far worse).  For very large K*P, chunk K with an
    # outer "arbitrary" grid axis instead of growing this array past SMEM.
    scal_flat = scal.reshape(-1)                                # (K*P*8,)

    kernel = _make_fused_kernel(
        tuple(tuple(int(j) for j in nb) for nb in neighbors),
        tuple(tuple(int(p) for p in cn) for cn in color_partition),
        K, P, TB)

    smem = pl.BlockSpec(memory_space=pltpu.MemorySpace.SMEM)
    hbm = pl.BlockSpec(memory_space=pl.ANY)
    big = pl.BlockSpec((P, TB, Np), lambda i: (0, i, 0))
    small = pl.BlockSpec((P, TB, 1), lambda i: (0, i, 0))

    a_out, w_out = pl.pallas_call(
        kernel,
        grid=(B_pad // TB,),
        out_shape=(jax.ShapeDtypeStruct((P, B_pad, Np), f32),
                   jax.ShapeDtypeStruct((P, B_pad, 1), f32)),
        in_specs=[smem, big, small, small, hbm],
        out_specs=(big, small),
        scratch_shapes=[pltpu.VMEM((P, TB, Np), f32),
                        pltpu.VMEM((P, TB, 1), f32)],
        compiler_params=pltpu.CompilerParams(
            dimension_semantics=("parallel",),
            vmem_limit_bytes=vmem_limit),
    )(scal_flat, x, y, w0, a0)

    a_out = a_out[:, :B, :N]
    w_out = w_out[:, :B, :]

    # test=False return: (a, omega, loss_arr, acc_arr)
    return a_out, w_out, [], []


# ---------------------------------------------------------------------------
# Pure-JAX reference (mirrors the torch forward, f32) for validation.
# ---------------------------------------------------------------------------
def dadmm_reference(hyp, no_hyp, ll, inputs, labels, neighbors, color_partition,
                    max_iter, a_init, omega_init):
    P, B, N = inputs.shape
    a, omega = a_init, omega_init
    mu = jnp.zeros((P, B, N), jnp.float32)
    lam = jnp.zeros((P, B, 1), jnp.float32)
    for k in range(max_iter + ll):
        hk = jnp.abs(no_hyp[k]) if k < ll else jnp.abs(hyp[k - ll])
        for color_nodes in color_partition:
            a_aux, w_aux = a, omega
            for p in color_nodes:
                nbrs = neighbors[p]
                dp = float(len(nbrs))
                sa = a[nbrs[0]]
                sw = omega[nbrs[0]]
                for j in nbrs[1:]:
                    sa = sa + a[j]
                    sw = sw + omega[j]
                x, ap, wp = inputs[p], a[p], omega[p]
                xa = jnp.sum(x * ap, axis=1, keepdims=True)
                grad_a = (x * xa + x * wp - x * labels[p]
                          + hk[p, 0] * ap * dp + dp * mu[p] - hk[p, 0] * sa)
                grad_w = (xa + wp - labels[p] + hk[p, 2] * wp * dp
                          + lam[p] * dp - hk[p, 2] * sw)
                a_aux = a_aux.at[p].set(ap - hk[p, 1] * grad_a)
                w_aux = w_aux.at[p].set(wp - hk[p, -1] * grad_w)
            a, omega = a_aux, w_aux
        mu_new, lam_new = [], []
        for p in range(P):
            nbrs = neighbors[p]
            dp = float(len(nbrs))
            sa = a[nbrs[0]]
            sw = omega[nbrs[0]]
            for j in nbrs[1:]:
                sa = sa + a[j]
                sw = sw + omega[j]
            mu_new.append(mu[p] + hk[p, 3] * (dp * a[p] - sa))
            lam_new.append(lam[p] + hk[p, 4] * (dp * omega[p] - sw))
        mu, lam = jnp.stack(mu_new), jnp.stack(lam_new)
    return a, omega


if __name__ == "__main__":
    # Small shapes consistent with the module (torch uses N = 28*28 = 784).
    P, B, N, H = 4, 12, 200, 6
    MAX_ITER, LL = 6, 2

    key = jax.random.PRNGKey(0)
    k1, k2, k3, k4, k5, k6 = jax.random.split(key, 6)

    inputs = 0.1 * jax.random.normal(k1, (P, B, N), jnp.float32)      # (P, B, N)
    labels = jax.random.bernoulli(k2, 0.5, (P, B, 1)).astype(jnp.float32)
    hyp = 0.01 * jax.random.uniform(k3, (MAX_ITER, P, H), jnp.float32)
    no_hyp = 0.01 * jax.random.uniform(k6, (LL, P, H), jnp.float32)

    # Deterministic a / omega init (torch: manual_seed + normal_ / uniform_).
    a0 = jax.random.normal(k4, (P, B, N), jnp.float32)
    omega0 = jax.random.uniform(k5, (P, B, 1), jnp.float32)

    # Ring graph over P nodes with a proper 2-coloring.
    neighbors = [[(p - 1) % P, (p + 1) % P] for p in range(P)]
    color_partition = [[0, 2], [1, 3]]

    a, omega, loss_arr, acc_arr = dadmm_lr_diff_forward(
        hyp, no_hyp, LL, inputs, labels, neighbors, color_partition,
        MAX_ITER, a0, omega0)
    jax.block_until_ready((a, omega))

    # Validate against the pure-JAX reference (tolerance-based: the factored
    # arithmetic reassociates f32 ops, so bit-exact equality is not expected).
    a_r, w_r = dadmm_reference(hyp, no_hyp, LL, inputs, labels, neighbors,
                               color_partition, MAX_ITER, a0, omega0)
    assert np.allclose(np.asarray(a), np.asarray(a_r), rtol=1e-3, atol=1e-3)
    assert np.allclose(np.asarray(omega), np.asarray(w_r), rtol=1e-3, atol=1e-3)

    print("KERNEL_OK")
</pallas_src>

<mosaic_0001>
module attributes {stable_mosaic.version = 11 : i64} {
  func.func @kernel(%arg0: i32, %arg1: memref<256xf32, #tpu.memory_space<smem>>, %arg2: memref<4x8x256xf32, #tpu.memory_space<vmem>>, %arg3: memref<4x8x1xf32, #tpu.memory_space<vmem>>, %arg4: memref<4x8x1xf32, #tpu.memory_space<vmem>>, %arg5: memref<4x16x256xf32, #tpu.memory_space<any>>, %arg6: memref<4x8x256xf32, #tpu.memory_space<vmem>>, %arg7: memref<4x8x1xf32, #tpu.memory_space<vmem>>, %arg8: memref<4x8x256xf32, #tpu.memory_space<vmem>>, %arg9: memref<4x8x1xf32, #tpu.memory_space<vmem>>) attributes {dimension_semantics = [#tpu.dimension_semantics<parallel>], iteration_bounds = array<i64: 2>, scalar_prefetch = 0 : i64, scratch_operands = 2 : i64, tpu.core_type = #tpu.core_type<tc>, window_params = [{transform_indices = @transform_0, window_bounds = array<i64: 256>}, {transform_indices = @transform_1, window_bounds = array<i64: 4, 8, 256>}, {transform_indices = @transform_2, window_bounds = array<i64: 4, 8, 1>}, {transform_indices = @transform_3, window_bounds = array<i64: 4, 8, 1>}, {}, {transform_indices = @transform_5, window_bounds = array<i64: 4, 8, 256>}, {transform_indices = @transform_6, window_bounds = array<i64: 4, 8, 1>}]} {
    %c8_i32 = arith.constant 8 : i32
    %0 = arith.muli %arg0, %c8_i32 : i32
    %1 = tpu.assume_multiple %0, 8 : i32
    "tpu.region"() ({
      %9 = tpu.sem_alloc : memref<!tpu.dma_semaphore, #tpu.memory_space<semaphore_mem>>
      %c0_i32_14 = arith.constant 0 : i32
      %c0_i32_15 = arith.constant 0 : i32
      %10 = tpu.memref_slice %arg5[%c0_i32_14, %1, %c0_i32_15] : memref<4x16x256xf32, #tpu.memory_space<any>> -> memref<4x8x256xf32, #tpu.memory_space<any>>
      tpu.enqueue_dma source(%10 : memref<4x8x256xf32, #tpu.memory_space<any>>) target(%arg6 : memref<4x8x256xf32, #tpu.memory_space<vmem>>) target_semaphore(%9 : memref<!tpu.dma_semaphore, #tpu.memory_space<semaphore_mem>>)
      %c0_i32_16 = arith.constant 0 : i32
      %c0_i32_17 = arith.constant 0 : i32
      %11 = tpu.memref_slice %arg5[%c0_i32_16, %1, %c0_i32_17] : memref<4x16x256xf32, #tpu.memory_space<any>> -> memref<4x8x256xf32, #tpu.memory_space<any>>
      tpu.wait_dma2 semaphore(%9 : memref<!tpu.dma_semaphore, #tpu.memory_space<semaphore_mem>>) src(%11 : memref<4x8x256xf32, #tpu.memory_space<any>>) dst(%arg6 : memref<4x8x256xf32, #tpu.memory_space<vmem>>)
      tpu.yield
    }) : () -> ()
    %c0 = arith.constant 0 : index
    %c0_0 = arith.constant 0 : index
    %c0_1 = arith.constant 0 : index
    %2 = vector.load %arg4[%c0, %c0_0, %c0_1] : memref<4x8x1xf32, #tpu.memory_space<vmem>>, vector<4x8x1xf32>
    %c0_2 = arith.constant 0 : index
    %c0_3 = arith.constant 0 : index
    %c0_4 = arith.constant 0 : index
    %3 = vector.load %arg7[%c0_2, %c0_3, %c0_4] : memref<4x8x1xf32, #tpu.memory_space<vmem>>, vector<4x8x1xf32>
    tpu.vector_store %arg7[%c0_2, %c0_3, %c0_4], %2 {strides = array<i32>} : memref<4x8x1xf32, #tpu.memory_space<vmem>>, vector<4x8x1xf32>,
    %cst = arith.constant 0.000000e+00 : f32
    %4 = vector.broadcast %cst : f32 to vector<4x8x256xf32>
    %c0_5 = arith.constant 0 : index
    %c0_6 = arith.constant 0 : index
    %c0_7 = arith.constant 0 : index
    %5 = vector.load %arg8[%c0_5, %c0_6, %c0_7] : memref<4x8x256xf32, #tpu.memory_space<vmem>>, vector<4x8x256xf32>
    tpu.vector_store %arg8[%c0_5, %c0_6, %c0_7], %4 {strides = array<i32>} : memref<4x8x256xf32, #tpu.memory_space<vmem>>, vector<4x8x256xf32>,
    %cst_8 = arith.constant 0.000000e+00 : f32
    %6 = vector.broadcast %cst_8 : f32 to vector<4x8x1xf32>
    %c0_9 = arith.constant 0 : index
    %c0_10 = arith.constant 0 : index
    %c0_11 = arith.constant 0 : index
    %7 = vector.load %arg9[%c0_9, %c0_10, %c0_11] : memref<4x8x1xf32, #tpu.memory_space<vmem>>, vector<4x8x1xf32>
    tpu.vector_store %arg9[%c0_9, %c0_10, %c0_11], %6 {strides = array<i32>} : memref<4x8x1xf32, #tpu.memory_space<vmem>>, vector<4x8x1xf32>,
    %c0_i32 = arith.constant 0 : i32
    %c8_i32_12 = arith.constant 8 : i32
    %8 = arith.addi %c0_i32, %c8_i32_12 : i32
    %c1_i32 = arith.constant 1 : i32
    scf.for %arg10 = %c0_i32 to %8 step %c1_i32  : i32 {
      %c1_i32_14 = arith.constant 1 : i32
      %9 = arith.muli %arg10, %c1_i32_14 : i32
      %c0_i32_15 = arith.constant 0 : i32
      %10 = arith.addi %c0_i32_15, %9 : i32
      %c32_i32 = arith.constant 32 : i32
      %11 = arith.muli %10, %c32_i32 : i32
      %c0_i32_16 = arith.constant 0 : i32
      %12 = arith.addi %11, %c0_i32_16 : i32
      %c0_i32_17 = arith.constant 0 : i32
      %13 = arith.addi %12, %c0_i32_17 : i32
      %14 = arith.index_cast %13 : i32 to index
      %15 = memref.load %arg1[%14] : memref<256xf32, #tpu.memory_space<smem>>
      %c1_i32_18 = arith.constant 1 : i32
      %16 = arith.addi %12, %c1_i32_18 : i32
      %17 = arith.index_cast %16 : i32 to index
      %18 = memref.load %arg1[%17] : memref<256xf32, #tpu.memory_space<smem>>
      %c2_i32 = arith.constant 2 : i32
      %19 = arith.addi %12, %c2_i32 : i32
      %20 = arith.index_cast %19 : i32 to index
      %21 = memref.load %arg1[%20] : memref<256xf32, #tpu.memory_space<smem>>
      %c3_i32 = arith.constant 3 : i32
      %22 = arith.addi %12, %c3_i32 : i32
      %23 = arith.index_cast %22 : i32 to index
      %24 = memref.load %arg1[%23] : memref<256xf32, #tpu.memory_space<smem>>
      %c4_i32 = arith.constant 4 : i32
      %25 = arith.addi %12, %c4_i32 : i32
      %26 = arith.index_cast %25 : i32 to index
      %27 = memref.load %arg1[%26] : memref<256xf32, #tpu.memory_space<smem>>
      %c5_i32 = arith.constant 5 : i32
      %28 = arith.addi %12, %c5_i32 : i32
      %29 = arith.index_cast %28 : i32 to index
      %30 = memref.load %arg1[%29] : memref<256xf32, #tpu.memory_space<smem>>
      %c0_19 = arith.constant 0 : index
      %c0_20 = arith.constant 0 : index
      %c0_21 = arith.constant 0 : index
      %31 = vector.load %arg2[%c0_19, %c0_20, %c0_21] : memref<4x8x256xf32, #tpu.memory_space<vmem>>, vector<1x8x256xf32>
      %32 = vector.shape_cast %31 : vector<1x8x256xf32> to vector<8x256xf32>
      %c0_22 = arith.constant 0 : index
      %c0_23 = arith.constant 0 : index
      %c0_24 = arith.constant 0 : index
      %33 = vector.load %arg6[%c0_22, %c0_23, %c0_24] : memref<4x8x256xf32, #tpu.memory_space<vmem>>, vector<1x8x256xf32>
      %34 = vector.shape_cast %33 : vector<1x8x256xf32> to vector<8x256xf32>
      %c0_25 = arith.constant 0 : index
      %c0_26 = arith.constant 0 : index
      %c0_27 = arith.constant 0 : index
      %35 = vector.load %arg7[%c0_25, %c0_26, %c0_27] : memref<4x8x1xf32, #tpu.memory_space<vmem>>, vector<1x8x1xf32>
      %36 = vector.shape_cast %35 : vector<1x8x1xf32> to vector<8x1xf32>
      %c0_28 = arith.constant 0 : index
      %c0_29 = arith.constant 0 : index
      %c0_30 = arith.constant 0 : index
      %37 = vector.load %arg3[%c0_28, %c0_29, %c0_30] : memref<4x8x1xf32, #tpu.memory_space<vmem>>, vector<1x8x1xf32>
      %38 = vector.shape_cast %37 : vector<1x8x1xf32> to vector<8x1xf32>
      %39 = arith.mulf %32, %34 : vector<8x256xf32>
      %cst_31 = arith.constant dense<0.000000e+00> : vector<8xf32>
      %40 = vector.multi_reduction <add>, %39, %cst_31 [1] : vector<8x256xf32> to vector<8xf32>
      %41 = vector.shape_cast %40 : vector<8xf32> to vector<8x1xf32>
      %42 = arith.addf %41, %36 : vector<8x1xf32>
      %43 = arith.subf %42, %38 : vector<8x1xf32>
      %c3 = arith.constant 3 : index
      %c0_32 = arith.constant 0 : index
      %c0_33 = arith.constant 0 : index
      %44 = vector.load %arg6[%c3, %c0_32, %c0_33] : memref<4x8x256xf32, #tpu.memory_space<vmem>>, vector<1x8x256xf32>
      %45 = vector.shape_cast %44 : vector<1x8x256xf32> to vector<8x256xf32>
      %c1 = arith.constant 1 : index
      %c0_34 = arith.constant 0 : index
      %c0_35 = arith.constant 0 : index
      %46 = vector.load %arg6[%c1, %c0_34, %c0_35] : memref<4x8x256xf32, #tpu.memory_space<vmem>>, vector<1x8x256xf32>
      %47 = vector.shape_cast %46 : vector<1x8x256xf32> to vector<8x256xf32>
      %48 = arith.addf %45, %47 : vector<8x256xf32>
      %c3_36 = arith.constant 3 : index
      %c0_37 = arith.constant 0 : index
      %c0_38 = arith.constant 0 : index
      %49 = vector.load %arg7[%c3_36, %c0_37, %c0_38] : memref<4x8x1xf32, #tpu.memory_space<vmem>>, vector<1x8x1xf32>
      %50 = vector.shape_cast %49 : vector<1x8x1xf32> to vector<8x1xf32>
      %c1_39 = arith.constant 1 : index
      %c0_40 = arith.constant 0 : index
      %c0_41 = arith.constant 0 : index
      %51 = vector.load %arg7[%c1_39, %c0_40, %c0_41] : memref<4x8x1xf32, #tpu.memory_space<vmem>>, vector<1x8x1xf32>
      %52 = vector.shape_cast %51 : vector<1x8x1xf32> to vector<8x1xf32>
      %53 = arith.addf %50, %52 : vector<8x1xf32>
      %54 = vector.broadcast %43 : vector<8x1xf32> to vector<8x256xf32>
      %55 = arith.mulf %32, %54 : vector<8x256xf32>
      %56 = vector.broadcast %21 : f32 to vector<8x256xf32>
      %57 = arith.mulf %56, %34 : vector<8x256xf32>
      %58 = arith.addf %55, %57 : vector<8x256xf32>
      %c0_42 = arith.constant 0 : index
      %c0_43 = arith.constant 0 : index
      %c0_44 = arith.constant 0 : index
      %59 = vector.load %arg8[%c0_42, %c0_43, %c0_44] : memref<4x8x256xf32, #tpu.memory_space<vmem>>, vector<1x8x256xf32>
      %60 = vector.shape_cast %59 : vector<1x8x256xf32> to vector<8x256xf32>
      %cst_45 = arith.constant 2.000000e+00 : f32
      %61 = vector.broadcast %cst_45 : f32 to vector<8x256xf32>
      %62 = arith.mulf %61, %60 : vector<8x256xf32>
      %63 = arith.addf %58, %62 : vector<8x256xf32>
      %64 = vector.broadcast %15 : f32 to vector<8x256xf32>
      %65 = arith.mulf %64, %48 : vector<8x256xf32>
      %66 = arith.subf %63, %65 : vector<8x256xf32>
      %67 = vector.broadcast %27 : f32 to vector<8x1xf32>
      %68 = arith.mulf %67, %36 : vector<8x1xf32>
      %69 = arith.addf %43, %68 : vector<8x1xf32>
      %c0_46 = arith.constant 0 : index
      %c0_47 = arith.constant 0 : index
      %c0_48 = arith.constant 0 : index
      %70 = vector.load %arg9[%c0_46, %c0_47, %c0_48] : memref<4x8x1xf32, #tpu.memory_space<vmem>>, vector<1x8x1xf32>
      %71 = vector.shape_cast %70 : vector<1x8x1xf32> to vector<8x1xf32>
      %cst_49 = arith.constant 2.000000e+00 : f32
      %72 = vector.broadcast %cst_49 : f32 to vector<8x1xf32>
      %73 = arith.mulf %72, %71 : vector<8x1xf32>
      %74 = arith.addf %69, %73 : vector<8x1xf32>
      %75 = vector.broadcast %24 : f32 to vector<8x1xf32>
      %76 = arith.mulf %75, %53 : vector<8x1xf32>
      %77 = arith.subf %74, %76 : vector<8x1xf32>
      %78 = vector.broadcast %18 : f32 to vector<8x256xf32>
      %79 = arith.mulf %78, %66 : vector<8x256xf32>
      %80 = arith.subf %34, %79 : vector<8x256xf32>
      %c0_50 = arith.constant 0 : index
      %c0_51 = arith.constant 0 : index
      %c0_52 = arith.constant 0 : index
      %81 = vector.load %arg6[%c0_50, %c0_51, %c0_52] : memref<4x8x256xf32, #tpu.memory_space<vmem>>, vector<1x8x256xf32>
      %82 = vector.shape_cast %81 : vector<1x8x256xf32> to vector<8x256xf32>
      %83 = vector.shape_cast %80 : vector<8x256xf32> to vector<1x8x256xf32>
      tpu.vector_store %arg6[%c0_50, %c0_51, %c0_52], %83 {strides = array<i32>} : memref<4x8x256xf32, #tpu.memory_space<vmem>>, vector<1x8x256xf32>,
      %84 = vector.broadcast %30 : f32 to vector<8x1xf32>
      %85 = arith.mulf %84, %77 : vector<8x1xf32>
      %86 = arith.subf %36, %85 : vector<8x1xf32>
      %c0_53 = arith.constant 0 : index
      %c0_54 = arith.constant 0 : index
      %c0_55 = arith.constant 0 : index
      %87 = vector.load %arg7[%c0_53, %c0_54, %c0_55] : memref<4x8x1xf32, #tpu.memory_space<vmem>>, vector<1x8x1xf32>
      %88 = vector.shape_cast %87 : vector<1x8x1xf32> to vector<8x1xf32>
      %89 = vector.shape_cast %86 : vector<8x1xf32> to vector<1x8x1xf32>
      tpu.vector_store %arg7[%c0_53, %c0_54, %c0_55], %89 {strides = array<i32>} : memref<4x8x1xf32, #tpu.memory_space<vmem>>, vector<1x8x1xf32>,
      %c16_i32 = arith.constant 16 : i32
      %90 = arith.addi %11, %c16_i32 : i32
      %c0_i32_56 = arith.constant 0 : i32
      %91 = arith.addi %90, %c0_i32_56 : i32
      %92 = arith.index_cast %91 : i32 to index
      %93 = memref.load %arg1[%92] : memref<256xf32, #tpu.memory_space<smem>>
      %c1_i32_57 = arith.constant 1 : i32
      %94 = arith.addi %90, %c1_i32_57 : i32
      %95 = arith.index_cast %94 : i32 to index
      %96 = memref.load %arg1[%95] : memref<256xf32, #tpu.memory_space<smem>>
      %c2_i32_58 = arith.constant 2 : i32
      %97 = arith.addi %90, %c2_i32_58 : i32
      %98 = arith.index_cast %97 : i32 to index
      %99 = memref.load %arg1[%98] : memref<256xf32, #tpu.memory_space<smem>>
      %c3_i32_59 = arith.constant 3 : i32
      %100 = arith.addi %90, %c3_i32_59 : i32
      %101 = arith.index_cast %100 : i32 to index
      %102 = memref.load %arg1[%101] : memref<256xf32, #tpu.memory_space<smem>>
      %c4_i32_60 = arith.constant 4 : i32
      %103 = arith.addi %90, %c4_i32_60 : i32
      %104 = arith.index_cast %103 : i32 to index
      %105 = memref.load %arg1[%104] : memref<256xf32, #tpu.memory_space<smem>>
      %c5_i32_61 = arith.constant 5 : i32
      %106 = arith.addi %90, %c5_i32_61 : i32
      %107 = arith.index_cast %106 : i32 to index
      %108 = memref.load %arg1[%107] : memref<256xf32, #tpu.memory_space<smem>>
      %c2 = arith.constant 2 : index
      %c0_62 = arith.constant 0 : index
      %c0_63 = arith.constant 0 : index
      %109 = vector.load %arg2[%c2, %c0_62, %c0_63] : memref<4x8x256xf32, #tpu.memory_space<vmem>>, vector<1x8x256xf32>
      %110 = vector.shape_cast %109 : vector<1x8x256xf32> to vector<8x256xf32>
      %c2_64 = arith.constant 2 : index
      %c0_65 = arith.constant 0 : index
      %c0_66 = arith.constant 0 : index
      %111 = vector.load %arg6[%c2_64, %c0_65, %c0_66] : memref<4x8x256xf32, #tpu.memory_space<vmem>>, vector<1x8x256xf32>
      %112 = vector.shape_cast %111 : vector<1x8x256xf32> to vector<8x256xf32>
      %c2_67 = arith.constant 2 : index
      %c0_68 = arith.constant 0 : index
      %c0_69 = arith.constant 0 : index
      %113 = vector.load %arg7[%c2_67, %c0_68, %c0_69] : memref<4x8x1xf32, #tpu.memory_space<vmem>>, vector<1x8x1xf32>
      %114 = vector.shape_cast %113 : vector<1x8x1xf32> to vector<8x1xf32>
      %c2_70 = arith.constant 2 : index
      %c0_71 = arith.constant 0 : index
      %c0_72 = arith.constant 0 : index
      %115 = vector.load %arg3[%c2_70, %c0_71, %c0_72] : memref<4x8x1xf32, #tpu.memory_space<vmem>>, vector<1x8x1xf32>
      %116 = vector.shape_cast %115 : vector<1x8x1xf32> to vector<8x1xf32>
      %117 = arith.mulf %110, %112 : vector<8x256xf32>
      %cst_73 = arith.constant dense<0.000000e+00> : vector<8xf32>
      %118 = vector.multi_reduction <add>, %117, %cst_73 [1] : vector<8x256xf32> to vector<8xf32>
      %119 = vector.shape_cast %118 : vector<8xf32> to vector<8x1xf32>
      %120 = arith.addf %119, %114 : vector<8x1xf32>
      %121 = arith.subf %120, %116 : vector<8x1xf32>
      %c1_74 = arith.constant 1 : index
      %c0_75 = arith.constant 0 : index
      %c0_76 = arith.constant 0 : index
      %122 = vector.load %arg6[%c1_74, %c0_75, %c0_76] : memref<4x8x256xf32, #tpu.memory_space<vmem>>, vector<1x8x256xf32>
      %123 = vector.shape_cast %122 : vector<1x8x256xf32> to vector<8x256xf32>
      %c3_77 = arith.constant 3 : index
      %c0_78 = arith.constant 0 : index
      %c0_79 = arith.constant 0 : index
      %124 = vector.load %arg6[%c3_77, %c0_78, %c0_79] : memref<4x8x256xf32, #tpu.memory_space<vmem>>, vector<1x8x256xf32>
      %125 = vector.shape_cast %124 : vector<1x8x256xf32> to vector<8x256xf32>
      %126 = arith.addf %123, %125 : vector<8x256xf32>
      %c1_80 = arith.constant 1 : index
      %c0_81 = arith.constant 0 : index
      %c0_82 = arith.constant 0 : index
      %127 = vector.load %arg7[%c1_80, %c0_81, %c0_82] : memref<4x8x1xf32, #tpu.memory_space<vmem>>, vector<1x8x1xf32>
      %128 = vector.shape_cast %127 : vector<1x8x1xf32> to vector<8x1xf32>
      %c3_83 = arith.constant 3 : index
      %c0_84 = arith.constant 0 : index
      %c0_85 = arith.constant 0 : index
      %129 = vector.load %arg7[%c3_83, %c0_84, %c0_85] : memref<4x8x1xf32, #tpu.memory_space<vmem>>, vector<1x8x1xf32>
      %130 = vector.shape_cast %129 : vector<1x8x1xf32> to vector<8x1xf32>
      %131 = arith.addf %128, %130 : vector<8x1xf32>
      %132 = vector.broadcast %121 : vector<8x1xf32> to vector<8x256xf32>
      %133 = arith.mulf %110, %132 : vector<8x256xf32>
      %134 = vector.broadcast %99 : f32 to vector<8x256xf32>
      %135 = arith.mulf %134, %112 : vector<8x256xf32>
      %136 = arith.addf %133, %135 : vector<8x256xf32>
      %c2_86 = arith.constant 2 : index
      %c0_87 = arith.constant 0 : index
      %c0_88 = arith.constant 0 : index
      %137 = vector.load %arg8[%c2_86, %c0_87, %c0_88] : memref<4x8x256xf32, #tpu.memory_space<vmem>>, vector<1x8x256xf32>
      %138 = vector.shape_cast %137 : vector<1x8x256xf32> to vector<8x256xf32>
      %cst_89 = arith.constant 2.000000e+00 : f32
      %139 = vector.broadcast %cst_89 : f32 to vector<8x256xf32>
      %140 = arith.mulf %139, %138 : vector<8x256xf32>
      %141 = arith.addf %136, %140 : vector<8x256xf32>
      %142 = vector.broadcast %93 : f32 to vector<8x256xf32>
      %143 = arith.mulf %142, %126 : vector<8x256xf32>
      %144 = arith.subf %141, %143 : vector<8x256xf32>
      %145 = vector.broadcast %105 : f32 to vector<8x1xf32>
      %146 = arith.mulf %145, %114 : vector<8x1xf32>
      %147 = arith.addf %121, %146 : vector<8x1xf32>
      %c2_90 = arith.constant 2 : index
      %c0_91 = arith.constant 0 : index
      %c0_92 = arith.constant 0 : index
      %148 = vector.load %arg9[%c2_90, %c0_91, %c0_92] : memref<4x8x1xf32, #tpu.memory_space<vmem>>, vector<1x8x1xf32>
      %149 = vector.shape_cast %148 : vector<1x8x1xf32> to vector<8x1xf32>
      %cst_93 = arith.constant 2.000000e+00 : f32
      %150 = vector.broadcast %cst_93 : f32 to vector<8x1xf32>
      %151 = arith.mulf %150, %149 : vector<8x1xf32>
      %152 = arith.addf %147, %151 : vector<8x1xf32>
      %153 = vector.broadcast %102 : f32 to vector<8x1xf32>
      %154 = arith.mulf %153, %131 : vector<8x1xf32>
      %155 = arith.subf %152, %154 : vector<8x1xf32>
      %156 = vector.broadcast %96 : f32 to vector<8x256xf32>
      %157 = arith.mulf %156, %144 : vector<8x256xf32>
      %158 = arith.subf %112, %157 : vector<8x256xf32>
      %c2_94 = arith.constant 2 : index
      %c0_95 = arith.constant 0 : index
      %c0_96 = arith.constant 0 : index
      %159 = vector.load %arg6[%c2_94, %c0_95, %c0_96] : memref<4x8x256xf32, #tpu.memory_space<vmem>>, vector<1x8x256xf32>
      %160 = vector.shape_cast %159 : vector<1x8x256xf32> to vector<8x256xf32>
      %161 = vector.shape_cast %158 : vector<8x256xf32> to vector<1x8x256xf32>
      tpu.vector_store %arg6[%c2_94, %c0_95, %c0_96], %161 {strides = array<i32>} : memref<4x8x256xf32, #tpu.memory_space<vmem>>, vector<1x8x256xf32>,
      %162 = vector.broadcast %108 : f32 to vector<8x1xf32>
      %163 = arith.mulf %162, %155 : vector<8x1xf32>
      %164 = arith.subf %114, %163 : vector<8x1xf32>
      %c2_97 = arith.constant 2 : index
      %c0_98 = arith.constant 0 : index
      %c0_99 = arith.constant 0 : index
      %165 = vector.load %arg7[%c2_97, %c0_98, %c0_99] : memref<4x8x1xf32, #tpu.memory_space<vmem>>, vector<1x8x1xf32>
      %166 = vector.shape_cast %165 : vector<1x8x1xf32> to vector<8x1xf32>
      %167 = vector.shape_cast %164 : vector<8x1xf32> to vector<1x8x1xf32>
      tpu.vector_store %arg7[%c2_97, %c0_98, %c0_99], %167 {strides = array<i32>} : memref<4x8x1xf32, #tpu.memory_space<vmem>>, vector<1x8x1xf32>,
      %c8_i32_100 = arith.constant 8 : i32
      %168 = arith.addi %11, %c8_i32_100 : i32
      %c0_i32_101 = arith.constant 0 : i32
      %169 = arith.addi %168, %c0_i32_101 : i32
      %170 = arith.index_cast %169 : i32 to index
      %171 = memref.load %arg1[%170] : memref<256xf32, #tpu.memory_space<smem>>
      %c1_i32_102 = arith.constant 1 : i32
      %172 = arith.addi %168, %c1_i32_102 : i32
      %173 = arith.index_cast %172 : i32 to index
      %174 = memref.load %arg1[%173] : memref<256xf32, #tpu.memory_space<smem>>
      %c2_i32_103 = arith.constant 2 : i32
      %175 = arith.addi %168, %c2_i32_103 : i32
      %176 = arith.index_cast %175 : i32 to index
      %177 = memref.load %arg1[%176] : memref<256xf32, #tpu.memory_space<smem>>
      %c3_i32_104 = arith.constant 3 : i32
      %178 = arith.addi %168, %c3_i32_104 : i32
      %179 = arith.index_cast %178 : i32 to index
      %180 = memref.load %arg1[%179] : memref<256xf32, #tpu.memory_space<smem>>
      %c4_i32_105 = arith.constant 4 : i32
      %181 = arith.addi %168, %c4_i32_105 : i32
      %182 = arith.index_cast %181 : i32 to index
      %183 = memref.load %arg1[%182] : memref<256xf32, #tpu.memory_space<smem>>
      %c5_i32_106 = arith.constant 5 : i32
      %184 = arith.addi %168, %c5_i32_106 : i32
      %185 = arith.index_cast %184 : i32 to index
      %186 = memref.load %arg1[%185] : memref<256xf32, #tpu.memory_space<smem>>
      %c1_107 = arith.constant 1 : index
      %c0_108 = arith.constant 0 : index
      %c0_109 = arith.constant 0 : index
      %187 = vector.load %arg2[%c1_107, %c0_108, %c0_109] : memref<4x8x256xf32, #tpu.memory_space<vmem>>, vector<1x8x256xf32>
      %188 = vector.shape_cast %187 : vector<1x8x256xf32> to vector<8x256xf32>
      %c1_110 = arith.constant 1 : index
      %c0_111 = arith.constant 0 : index
      %c0_112 = arith.constant 0 : index
      %189 = vector.load %arg6[%c1_110, %c0_111, %c0_112] : memref<4x8x256xf32, #tpu.memory_space<vmem>>, vector<1x8x256xf32>
      %190 = vector.shape_cast %189 : vector<1x8x256xf32> to vector<8x256xf32>
      %c1_113 = arith.constant 1 : index
      %c0_114 = arith.constant 0 : index
      %c0_115 = arith.constant 0 : index
      %191 = vector.load %arg7[%c1_113, %c0_114, %c0_115] : memref<4x8x1xf32, #tpu.memory_space<vmem>>, vector<1x8x1xf32>
      %192 = vector.shape_cast %191 : vector<1x8x1xf32> to vector<8x1xf32>
      %c1_116 = arith.constant 1 : index
      %c0_117 = arith.constant 0 : index
      %c0_118 = arith.constant 0 : index
      %193 = vector.load %arg3[%c1_116, %c0_117, %c0_118] : memref<4x8x1xf32, #tpu.memory_space<vmem>>, vector<1x8x1xf32>
      %194 = vector.shape_cast %193 : vector<1x8x1xf32> to vector<8x1xf32>
      %195 = arith.mulf %188, %190 : vector<8x256xf32>
      %cst_119 = arith.constant dense<0.000000e+00> : vector<8xf32>
      %196 = vector.multi_reduction <add>, %195, %cst_119 [1] : vector<8x256xf32> to vector<8xf32>
      %197 = vector.shape_cast %196 : vector<8xf32> to vector<8x1xf32>
      %198 = arith.addf %197, %192 : vector<8x1xf32>
      %199 = arith.subf %198, %194 : vector<8x1xf32>
      %c0_120 = arith.constant 0 : index
      %c0_121 = arith.constant 0 : index
      %c0_122 = arith.constant 0 : index
      %200 = vector.load %arg6[%c0_120, %c0_121, %c0_122] : memref<4x8x256xf32, #tpu.memory_space<vmem>>, vector<1x8x256xf32>
      %201 = vector.shape_cast %200 : vector<1x8x256xf32> to vector<8x256xf32>
      %c2_123 = arith.constant 2 : index
      %c0_124 = arith.constant 0 : index
      %c0_125 = arith.constant 0 : index
      %202 = vector.load %arg6[%c2_123, %c0_124, %c0_125] : memref<4x8x256xf32, #tpu.memory_space<vmem>>, vector<1x8x256xf32>
      %203 = vector.shape_cast %202 : vector<1x8x256xf32> to vector<8x256xf32>
      %204 = arith.addf %201, %203 : vector<8x256xf32>
      %c0_126 = arith.constant 0 : index
      %c0_127 = arith.constant 0 : index
      %c0_128 = arith.constant 0 : index
      %205 = vector.load %arg7[%c0_126, %c0_127, %c0_128] : memref<4x8x1xf32, #tpu.memory_space<vmem>>, vector<1x8x1xf32>
      %206 = vector.shape_cast %205 : vector<1x8x1xf32> to vector<8x1xf32>
      %c2_129 = arith.constant 2 : index
      %c0_130 = arith.constant 0 : index
      %c0_131 = arith.constant 0 : index
      %207 = vector.load %arg7[%c2_129, %c0_130, %c0_131] : memref<4x8x1xf32, #tpu.memory_space<vmem>>, vector<1x8x1xf32>
      %208 = vector.shape_cast %207 : vector<1x8x1xf32> to vector<8x1xf32>
      %209 = arith.addf %206, %208 : vector<8x1xf32>
      %210 = vector.broadcast %199 : vector<8x1xf32> to vector<8x256xf32>
      %211 = arith.mulf %188, %210 : vector<8x256xf32>
      %212 = vector.broadcast %177 : f32 to vector<8x256xf32>
      %213 = arith.mulf %212, %190 : vector<8x256xf32>
      %214 = arith.addf %211, %213 : vector<8x256xf32>
      %c1_132 = arith.constant 1 : index
      %c0_133 = arith.constant 0 : index
      %c0_134 = arith.constant 0 : index
      %215 = vector.load %arg8[%c1_132, %c0_133, %c0_134] : memref<4x8x256xf32, #tpu.memory_space<vmem>>, vector<1x8x256xf32>
      %216 = vector.shape_cast %215 : vector<1x8x256xf32> to vector<8x256xf32>
      %cst_135 = arith.constant 2.000000e+00 : f32
      %217 = vector.broadcast %cst_135 : f32 to vector<8x256xf32>
      %218 = arith.mulf %217, %216 : vector<8x256xf32>
      %219 = arith.addf %214, %218 : vector<8x256xf32>
      %220 = vector.broadcast %171 : f32 to vector<8x256xf32>
      %221 = arith.mulf %220, %204 : vector<8x256xf32>
      %222 = arith.subf %219, %221 : vector<8x256xf32>
      %223 = vector.broadcast %183 : f32 to vector<8x1xf32>
      %224 = arith.mulf %223, %192 : vector<8x1xf32>
      %225 = arith.addf %199, %224 : vector<8x1xf32>
      %c1_136 = arith.constant 1 : index
      %c0_137 = arith.constant 0 : index
      %c0_138 = arith.constant 0 : index
      %226 = vector.load %arg9[%c1_136, %c0_137, %c0_138] : memref<4x8x1xf32, #tpu.memory_space<vmem>>, vector<1x8x1xf32>
      %227 = vector.shape_cast %226 : vector<1x8x1xf32> to vector<8x1xf32>
      %cst_139 = arith.constant 2.000000e+00 : f32
      %228 = vector.broadcast %cst_139 : f32 to vector<8x1xf32>
      %229 = arith.mulf %228, %227 : vector<8x1xf32>
      %230 = arith.addf %225, %229 : vector<8x1xf32>
      %231 = vector.broadcast %180 : f32 to vector<8x1xf32>
      %232 = arith.mulf %231, %209 : vector<8x1xf32>
      %233 = arith.subf %230, %232 : vector<8x1xf32>
      %234 = vector.broadcast %174 : f32 to vector<8x256xf32>
      %235 = arith.mulf %234, %222 : vector<8x256xf32>
      %236 = arith.subf %190, %235 : vector<8x256xf32>
      %c1_140 = arith.constant 1 : index
      %c0_141 = arith.constant 0 : index
      %c0_142 = arith.constant 0 : index
      %237 = vector.load %arg6[%c1_140, %c0_141, %c0_142] : memref<4x8x256xf32, #tpu.memory_space<vmem>>, vector<1x8x256xf32>
      %238 = vector.shape_cast %237 : vector<1x8x256xf32> to vector<8x256xf32>
      %239 = vector.shape_cast %236 : vector<8x256xf32> to vector<1x8x256xf32>
      tpu.vector_store %arg6[%c1_140, %c0_141, %c0_142], %239 {strides = array<i32>} : memref<4x8x256xf32, #tpu.memory_space<vmem>>, vector<1x8x256xf32>,
      %240 = vector.broadcast %186 : f32 to vector<8x1xf32>
      %241 = arith.mulf %240, %233 : vector<8x1xf32>
      %242 = arith.subf %192, %241 : vector<8x1xf32>
      %c1_143 = arith.constant 1 : index
      %c0_144 = arith.constant 0 : index
      %c0_145 = arith.constant 0 : index
      %243 = vector.load %arg7[%c1_143, %c0_144, %c0_145] : memref<4x8x1xf32, #tpu.memory_space<vmem>>, vector<1x8x1xf32>
      %244 = vector.shape_cast %243 : vector<1x8x1xf32> to vector<8x1xf32>
      %245 = vector.shape_cast %242 : vector<8x1xf32> to vector<1x8x1xf32>
      tpu.vector_store %arg7[%c1_143, %c0_144, %c0_145], %245 {strides = array<i32>} : memref<4x8x1xf32, #tpu.memory_space<vmem>>, vector<1x8x1xf32>,
      %c24_i32 = arith.constant 24 : i32
      %246 = arith.addi %11, %c24_i32 : i32
      %c0_i32_146 = arith.constant 0 : i32
      %247 = arith.addi %246, %c0_i32_146 : i32
      %248 = arith.index_cast %247 : i32 to index
      %249 = memref.load %arg1[%248] : memref<256xf32, #tpu.memory_space<smem>>
      %c1_i32_147 = arith.constant 1 : i32
      %250 = arith.addi %246, %c1_i32_147 : i32
      %251 = arith.index_cast %250 : i32 to index
      %252 = memref.load %arg1[%251] : memref<256xf32, #tpu.memory_space<smem>>
      %c2_i32_148 = arith.constant 2 : i32
      %253 = arith.addi %246, %c2_i32_148 : i32
      %254 = arith.index_cast %253 : i32 to index
      %255 = memref.load %arg1[%254] : memref<256xf32, #tpu.memory_space<smem>>
      %c3_i32_149 = arith.constant 3 : i32
      %256 = arith.addi %246, %c3_i32_149 : i32
      %257 = arith.index_cast %256 : i32 to index
      %258 = memref.load %arg1[%257] : memref<256xf32, #tpu.memory_space<smem>>
      %c4_i32_150 = arith.constant 4 : i32
      %259 = arith.addi %246, %c4_i32_150 : i32
      %260 = arith.index_cast %259 : i32 to index
      %261 = memref.load %arg1[%260] : memref<256xf32, #tpu.memory_space<smem>>
      %c5_i32_151 = arith.constant 5 : i32
      %262 = arith.addi %246, %c5_i32_151 : i32
      %263 = arith.index_cast %262 : i32 to index
      %264 = memref.load %arg1[%263] : memref<256xf32, #tpu.memory_space<smem>>
      %c3_152 = arith.constant 3 : index
      %c0_153 = arith.constant 0 : index
      %c0_154 = arith.constant 0 : index
      %265 = vector.load %arg2[%c3_152, %c0_153, %c0_154] : memref<4x8x256xf32, #tpu.memory_space<vmem>>, vector<1x8x256xf32>
      %266 = vector.shape_cast %265 : vector<1x8x256xf32> to vector<8x256xf32>
      %c3_155 = arith.constant 3 : index
      %c0_156 = arith.constant 0 : index
      %c0_157 = arith.constant 0 : index
      %267 = vector.load %arg6[%c3_155, %c0_156, %c0_157] : memref<4x8x256xf32, #tpu.memory_space<vmem>>, vector<1x8x256xf32>
      %268 = vector.shape_cast %267 : vector<1x8x256xf32> to vector<8x256xf32>
      %c3_158 = arith.constant 3 : index
      %c0_159 = arith.constant 0 : index
      %c0_160 = arith.constant 0 : index
      %269 = vector.load %arg7[%c3_158, %c0_159, %c0_160] : memref<4x8x1xf32, #tpu.memory_space<vmem>>, vector<1x8x1xf32>
      %270 = vector.shape_cast %269 : vector<1x8x1xf32> to vector<8x1xf32>
      %c3_161 = arith.constant 3 : index
      %c0_162 = arith.constant 0 : index
      %c0_163 = arith.constant 0 : index
      %271 = vector.load %arg3[%c3_161, %c0_162, %c0_163] : memref<4x8x1xf32, #tpu.memory_space<vmem>>, vector<1x8x1xf32>
      %272 = vector.shape_cast %271 : vector<1x8x1xf32> to vector<8x1xf32>
      %273 = arith.mulf %266, %268 : vector<8x256xf32>
      %cst_164 = arith.constant dense<0.000000e+00> : vector<8xf32>
      %274 = vector.multi_reduction <add>, %273, %cst_164 [1] : vector<8x256xf32> to vector<8xf32>
      %275 = vector.shape_cast %274 : vector<8xf32> to vector<8x1xf32>
      %276 = arith.addf %275, %270 : vector<8x1xf32>
      %277 = arith.subf %276, %272 : vector<8x1xf32>
      %c2_165 = arith.constant 2 : index
      %c0_166 = arith.constant 0 : index
      %c0_167 = arith.constant 0 : index
      %278 = vector.load %arg6[%c2_165, %c0_166, %c0_167] : memref<4x8x256xf32, #tpu.memory_space<vmem>>, vector<1x8x256xf32>
      %279 = vector.shape_cast %278 : vector<1x8x256xf32> to vector<8x256xf32>
      %c0_168 = arith.constant 0 : index
      %c0_169 = arith.constant 0 : index
      %c0_170 = arith.constant 0 : index
      %280 = vector.load %arg6[%c0_168, %c0_169, %c0_170] : memref<4x8x256xf32, #tpu.memory_space<vmem>>, vector<1x8x256xf32>
      %281 = vector.shape_cast %280 : vector<1x8x256xf32> to vector<8x256xf32>
      %282 = arith.addf %279, %281 : vector<8x256xf32>
      %c2_171 = arith.constant 2 : index
      %c0_172 = arith.constant 0 : index
      %c0_173 = arith.constant 0 : index
      %283 = vector.load %arg7[%c2_171, %c0_172, %c0_173] : memref<4x8x1xf32, #tpu.memory_space<vmem>>, vector<1x8x1xf32>
      %284 = vector.shape_cast %283 : vector<1x8x1xf32> to vector<8x1xf32>
      %c0_174 = arith.constant 0 : index
      %c0_175 = arith.constant 0 : index
      %c0_176 = arith.constant 0 : index
      %285 = vector.load %arg7[%c0_174, %c0_175, %c0_176] : memref<4x8x1xf32, #tpu.memory_space<vmem>>, vector<1x8x1xf32>
      %286 = vector.shape_cast %285 : vector<1x8x1xf32> to vector<8x1xf32>
      %287 = arith.addf %284, %286 : vector<8x1xf32>
      %288 = vector.broadcast %277 : vector<8x1xf32> to vector<8x256xf32>
      %289 = arith.mulf %266, %288 : vector<8x256xf32>
      %290 = vector.broadcast %255 : f32 to vector<8x256xf32>
      %291 = arith.mulf %290, %268 : vector<8x256xf32>
      %292 = arith.addf %289, %291 : vector<8x256xf32>
      %c3_177 = arith.constant 3 : index
      %c0_178 = arith.constant 0 : index
      %c0_179 = arith.constant 0 : index
      %293 = vector.load %arg8[%c3_177, %c0_178, %c0_179] : memref<4x8x256xf32, #tpu.memory_space<vmem>>, vector<1x8x256xf32>
      %294 = vector.shape_cast %293 : vector<1x8x256xf32> to vector<8x256xf32>
      %cst_180 = arith.constant 2.000000e+00 : f32
      %295 = vector.broadcast %cst_180 : f32 to vector<8x256xf32>
      %296 = arith.mulf %295, %294 : vector<8x256xf32>
      %297 = arith.addf %292, %296 : vector<8x256xf32>
      %298 = vector.broadcast %249 : f32 to vector<8x256xf32>
      %299 = arith.mulf %298, %282 : vector<8x256xf32>
      %300 = arith.subf %297, %299 : vector<8x256xf32>
      %301 = vector.broadcast %261 : f32 to vector<8x1xf32>
      %302 = arith.mulf %301, %270 : vector<8x1xf32>
      %303 = arith.addf %277, %302 : vector<8x1xf32>
      %c3_181 = arith.constant 3 : index
      %c0_182 = arith.constant 0 : index
      %c0_183 = arith.constant 0 : index
      %304 = vector.load %arg9[%c3_181, %c0_182, %c0_183] : memref<4x8x1xf32, #tpu.memory_space<vmem>>, vector<1x8x1xf32>
      %305 = vector.shape_cast %304 : vector<1x8x1xf32> to vector<8x1xf32>
      %cst_184 = arith.constant 2.000000e+00 : f32
      %306 = vector.broadcast %cst_184 : f32 to vector<8x1xf32>
      %307 = arith.mulf %306, %305 : vector<8x1xf32>
      %308 = arith.addf %303, %307 : vector<8x1xf32>
      %309 = vector.broadcast %258 : f32 to vector<8x1xf32>
      %310 = arith.mulf %309, %287 : vector<8x1xf32>
      %311 = arith.subf %308, %310 : vector<8x1xf32>
      %312 = vector.broadcast %252 : f32 to vector<8x256xf32>
      %313 = arith.mulf %312, %300 : vector<8x256xf32>
      %314 = arith.subf %268, %313 : vector<8x256xf32>
      %c3_185 = arith.constant 3 : index
      %c0_186 = arith.constant 0 : index
      %c0_187 = arith.constant 0 : index
      %315 = vector.load %arg6[%c3_185, %c0_186, %c0_187] : memref<4x8x256xf32, #tpu.memory_space<vmem>>, vector<1x8x256xf32>
      %316 = vector.shape_cast %315 : vector<1x8x256xf32> to vector<8x256xf32>
      %317 = vector.shape_cast %314 : vector<8x256xf32> to vector<1x8x256xf32>
      tpu.vector_store %arg6[%c3_185, %c0_186, %c0_187], %317 {strides = array<i32>} : memref<4x8x256xf32, #tpu.memory_space<vmem>>, vector<1x8x256xf32>,
      %318 = vector.broadcast %264 : f32 to vector<8x1xf32>
      %319 = arith.mulf %318, %311 : vector<8x1xf32>
      %320 = arith.subf %270, %319 : vector<8x1xf32>
      %c3_188 = arith.constant 3 : index
      %c0_189 = arith.constant 0 : index
      %c0_190 = arith.constant 0 : index
      %321 = vector.load %arg7[%c3_188, %c0_189, %c0_190] : memref<4x8x1xf32, #tpu.memory_space<vmem>>, vector<1x8x1xf32>
      %322 = vector.shape_cast %321 : vector<1x8x1xf32> to vector<8x1xf32>
      %323 = vector.shape_cast %320 : vector<8x1xf32> to vector<1x8x1xf32>
      tpu.vector_store %arg7[%c3_188, %c0_189, %c0_190], %323 {strides = array<i32>} : memref<4x8x1xf32, #tpu.memory_space<vmem>>, vector<1x8x1xf32>,
      %c0_i32_191 = arith.constant 0 : i32
      %324 = arith.addi %11, %c0_i32_191 : i32
      %c6_i32 = arith.constant 6 : i32
      %325 = arith.addi %324, %c6_i32 : i32
      %326 = arith.index_cast %325 : i32 to index
      %327 = memref.load %arg1[%326] : memref<256xf32, #tpu.memory_space<smem>>
      %c7_i32 = arith.constant 7 : i32
      %328 = arith.addi %324, %c7_i32 : i32
      %329 = arith.index_cast %328 : i32 to index
      %330 = memref.load %arg1[%329] : memref<256xf32, #tpu.memory_space<smem>>
      %c0_192 = arith.constant 0 : index
      %c0_193 = arith.constant 0 : index
      %c0_194 = arith.constant 0 : index
      %331 = vector.load %arg8[%c0_192, %c0_193, %c0_194] : memref<4x8x256xf32, #tpu.memory_space<vmem>>, vector<1x8x256xf32>
      %332 = vector.shape_cast %331 : vector<1x8x256xf32> to vector<8x256xf32>
      %c0_195 = arith.constant 0 : index
      %c0_196 = arith.constant 0 : index
      %c0_197 = arith.constant 0 : index
      %333 = vector.load %arg6[%c0_195, %c0_196, %c0_197] : memref<4x8x256xf32, #tpu.memory_space<vmem>>, vector<1x8x256xf32>
      %334 = vector.shape_cast %333 : vector<1x8x256xf32> to vector<8x256xf32>
      %cst_198 = arith.constant 2.000000e+00 : f32
      %335 = vector.broadcast %cst_198 : f32 to vector<8x256xf32>
      %336 = arith.mulf %335, %334 : vector<8x256xf32>
      %c3_199 = arith.constant 3 : index
      %c0_200 = arith.constant 0 : index
      %c0_201 = arith.constant 0 : index
      %337 = vector.load %arg6[%c3_199, %c0_200, %c0_201] : memref<4x8x256xf32, #tpu.memory_space<vmem>>, vector<1x8x256xf32>
      %338 = vector.shape_cast %337 : vector<1x8x256xf32> to vector<8x256xf32>
      %c1_202 = arith.constant 1 : index
      %c0_203 = arith.constant 0 : index
      %c0_204 = arith.constant 0 : index
      %339 = vector.load %arg6[%c1_202, %c0_203, %c0_204] : memref<4x8x256xf32, #tpu.memory_space<vmem>>, vector<1x8x256xf32>
      %340 = vector.shape_cast %339 : vector<1x8x256xf32> to vector<8x256xf32>
      %341 = arith.addf %338, %340 : vector<8x256xf32>
      %342 = arith.subf %336, %341 : vector<8x256xf32>
      %343 = vector.broadcast %327 : f32 to vector<8x256xf32>
      %344 = arith.mulf %343, %342 : vector<8x256xf32>
      %345 = arith.addf %332, %344 : vector<8x256xf32>
      %c0_205 = arith.constant 0 : index
      %c0_206 = arith.constant 0 : index
      %c0_207 = arith.constant 0 : index
      %346 = vector.load %arg8[%c0_205, %c0_206, %c0_207] : memref<4x8x256xf32, #tpu.memory_space<vmem>>, vector<1x8x256xf32>
      %347 = vector.shape_cast %346 : vector<1x8x256xf32> to vector<8x256xf32>
      %348 = vector.shape_cast %345 : vector<8x256xf32> to vector<1x8x256xf32>
      tpu.vector_store %arg8[%c0_205, %c0_206, %c0_207], %348 {strides = array<i32>} : memref<4x8x256xf32, #tpu.memory_space<vmem>>, vector<1x8x256xf32>,
      %c0_208 = arith.constant 0 : index
      %c0_209 = arith.constant 0 : index
      %c0_210 = arith.constant 0 : index
      %349 = vector.load %arg9[%c0_208, %c0_209, %c0_210] : memref<4x8x1xf32, #tpu.memory_space<vmem>>, vector<1x8x1xf32>
      %350 = vector.shape_cast %349 : vector<1x8x1xf32> to vector<8x1xf32>
      %c0_211 = arith.constant 0 : index
      %c0_212 = arith.constant 0 : index
      %c0_213 = arith.constant 0 : index
      %351 = vector.load %arg7[%c0_211, %c0_212, %c0_213] : memref<4x8x1xf32, #tpu.memory_space<vmem>>, vector<1x8x1xf32>
      %352 = vector.shape_cast %351 : vector<1x8x1xf32> to vector<8x1xf32>
      %cst_214 = arith.constant 2.000000e+00 : f32
      %353 = vector.broadcast %cst_214 : f32 to vector<8x1xf32>
      %354 = arith.mulf %353, %352 : vector<8x1xf32>
      %c3_215 = arith.constant 3 : index
      %c0_216 = arith.constant 0 : index
      %c0_217 = arith.constant 0 : index
      %355 = vector.load %arg7[%c3_215, %c0_216, %c0_217] : memref<4x8x1xf32, #tpu.memory_space<vmem>>, vector<1x8x1xf32>
      %356 = vector.shape_cast %355 : vector<1x8x1xf32> to vector<8x1xf32>
      %c1_218 = arith.constant 1 : index
      %c0_219 = arith.constant 0 : index
      %c0_220 = arith.constant 0 : index
      %357 = vector.load %arg7[%c1_218, %c0_219, %c0_220] : memref<4x8x1xf32, #tpu.memory_space<vmem>>, vector<1x8x1xf32>
      %358 = vector.shape_cast %357 : vector<1x8x1xf32> to vector<8x1xf32>
      %359 = arith.addf %356, %358 : vector<8x1xf32>
      %360 = arith.subf %354, %359 : vector<8x1xf32>
      %361 = vector.broadcast %330 : f32 to vector<8x1xf32>
      %362 = arith.mulf %361, %360 : vector<8x1xf32>
      %363 = arith.addf %350, %362 : vector<8x1xf32>
      %c0_221 = arith.constant 0 : index
      %c0_222 = arith.constant 0 : index
      %c0_223 = arith.constant 0 : index
      %364 = vector.load %arg9[%c0_221, %c0_222, %c0_223] : memref<4x8x1xf32, #tpu.memory_space<vmem>>, vector<1x8x1xf32>
      %365 = vector.shape_cast %364 : vector<1x8x1xf32> to vector<8x1xf32>
      %366 = vector.shape_cast %363 : vector<8x1xf32> to vector<1x8x1xf32>
      tpu.vector_store %arg9[%c0_221, %c0_222, %c0_223], %366 {strides = array<i32>} : memref<4x8x1xf32, #tpu.memory_space<vmem>>, vector<1x8x1xf32>,
      %c8_i32_224 = arith.constant 8 : i32
      %367 = arith.addi %11, %c8_i32_224 : i32
      %c6_i32_225 = arith.constant 6 : i32
      %368 = arith.addi %367, %c6_i32_225 : i32
      %369 = arith.index_cast %368 : i32 to index
      %370 = memref.load %arg1[%369] : memref<256xf32, #tpu.memory_space<smem>>
      %c7_i32_226 = arith.constant 7 : i32
      %371 = arith.addi %367, %c7_i32_226 : i32
      %372 = arith.index_cast %371 : i32 to index
      %373 = memref.load %arg1[%372] : memref<256xf32, #tpu.memory_space<smem>>
      %c1_227 = arith.constant 1 : index
      %c0_228 = arith.constant 0 : index
      %c0_229 = arith.constant 0 : index
      %374 = vector.load %arg8[%c1_227, %c0_228, %c0_229] : memref<4x8x256xf32, #tpu.memory_space<vmem>>, vector<1x8x256xf32>
      %375 = vector.shape_cast %374 : vector<1x8x256xf32> to vector<8x256xf32>
      %c1_230 = arith.constant 1 : index
      %c0_231 = arith.constant 0 : index
      %c0_232 = arith.constant 0 : index
      %376 = vector.load %arg6[%c1_230, %c0_231, %c0_232] : memref<4x8x256xf32, #tpu.memory_space<vmem>>, vector<1x8x256xf32>
      %377 = vector.shape_cast %376 : vector<1x8x256xf32> to vector<8x256xf32>
      %cst_233 = arith.constant 2.000000e+00 : f32
      %378 = vector.broadcast %cst_233 : f32 to vector<8x256xf32>
      %379 = arith.mulf %378, %377 : vector<8x256xf32>
      %c0_234 = arith.constant 0 : index
      %c0_235 = arith.constant 0 : index
      %c0_236 = arith.constant 0 : index
      %380 = vector.load %arg6[%c0_234, %c0_235, %c0_236] : memref<4x8x256xf32, #tpu.memory_space<vmem>>, vector<1x8x256xf32>
      %381 = vector.shape_cast %380 : vector<1x8x256xf32> to vector<8x256xf32>
      %c2_237 = arith.constant 2 : index
      %c0_238 = arith.constant 0 : index
      %c0_239 = arith.constant 0 : index
      %382 = vector.load %arg6[%c2_237, %c0_238, %c0_239] : memref<4x8x256xf32, #tpu.memory_space<vmem>>, vector<1x8x256xf32>
      %383 = vector.shape_cast %382 : vector<1x8x256xf32> to vector<8x256xf32>
      %384 = arith.addf %381, %383 : vector<8x256xf32>
      %385 = arith.subf %379, %384 : vector<8x256xf32>
      %386 = vector.broadcast %370 : f32 to vector<8x256xf32>
      %387 = arith.mulf %386, %385 : vector<8x256xf32>
      %388 = arith.addf %375, %387 : vector<8x256xf32>
      %c1_240 = arith.constant 1 : index
      %c0_241 = arith.constant 0 : index
      %c0_242 = arith.constant 0 : index
      %389 = vector.load %arg8[%c1_240, %c0_241, %c0_242] : memref<4x8x256xf32, #tpu.memory_space<vmem>>, vector<1x8x256xf32>
      %390 = vector.shape_cast %389 : vector<1x8x256xf32> to vector<8x256xf32>
      %391 = vector.shape_cast %388 : vector<8x256xf32> to vector<1x8x256xf32>
      tpu.vector_store %arg8[%c1_240, %c0_241, %c0_242], %391 {strides = array<i32>} : memref<4x8x256xf32, #tpu.memory_space<vmem>>, vector<1x8x256xf32>,
      %c1_243 = arith.constant 1 : index
      %c0_244 = arith.constant 0 : index
      %c0_245 = arith.constant 0 : index
      %392 = vector.load %arg9[%c1_243, %c0_244, %c0_245] : memref<4x8x1xf32, #tpu.memory_space<vmem>>, vector<1x8x1xf32>
      %393 = vector.shape_cast %392 : vector<1x8x1xf32> to vector<8x1xf32>
      %c1_246 = arith.constant 1 : index
      %c0_247 = arith.constant 0 : index
      %c0_248 = arith.constant 0 : index
      %394 = vector.load %arg7[%c1_246, %c0_247, %c0_248] : memref<4x8x1xf32, #tpu.memory_space<vmem>>, vector<1x8x1xf32>
      %395 = vector.shape_cast %394 : vector<1x8x1xf32> to vector<8x1xf32>
      %cst_249 = arith.constant 2.000000e+00 : f32
      %396 = vector.broadcast %cst_249 : f32 to vector<8x1xf32>
      %397 = arith.mulf %396, %395 : vector<8x1xf32>
      %c0_250 = arith.constant 0 : index
      %c0_251 = arith.constant 0 : index
      %c0_252 = arith.constant 0 : index
      %398 = vector.load %arg7[%c0_250, %c0_251, %c0_252] : memref<4x8x1xf32, #tpu.memory_space<vmem>>, vector<1x8x1xf32>
      %399 = vector.shape_cast %398 : vector<1x8x1xf32> to vector<8x1xf32>
      %c2_253 = arith.constant 2 : index
      %c0_254 = arith.constant 0 : index
      %c0_255 = arith.constant 0 : index
      %400 = vector.load %arg7[%c2_253, %c0_254, %c0_255] : memref<4x8x1xf32, #tpu.memory_space<vmem>>, vector<1x8x1xf32>
      %401 = vector.shape_cast %400 : vector<1x8x1xf32> to vector<8x1xf32>
      %402 = arith.addf %399, %401 : vector<8x1xf32>
      %403 = arith.subf %397, %402 : vector<8x1xf32>
      %404 = vector.broadcast %373 : f32 to vector<8x1xf32>
      %405 = arith.mulf %404, %403 : vector<8x1xf32>
      %406 = arith.addf %393, %405 : vector<8x1xf32>
      %c1_256 = arith.constant 1 : index
      %c0_257 = arith.constant 0 : index
      %c0_258 = arith.constant 0 : index
      %407 = vector.load %arg9[%c1_256, %c0_257, %c0_258] : memref<4x8x1xf32, #tpu.memory_space<vmem>>, vector<1x8x1xf32>
      %408 = vector.shape_cast %407 : vector<1x8x1xf32> to vector<8x1xf32>
      %409 = vector.shape_cast %406 : vector<8x1xf32> to vector<1x8x1xf32>
      tpu.vector_store %arg9[%c1_256, %c0_257, %c0_258], %409 {strides = array<i32>} : memref<4x8x1xf32, #tpu.memory_space<vmem>>, vector<1x8x1xf32>,
      %c16_i32_259 = arith.constant 16 : i32
      %410 = arith.addi %11, %c16_i32_259 : i32
      %c6_i32_260 = arith.constant 6 : i32
      %411 = arith.addi %410, %c6_i32_260 : i32
      %412 = arith.index_cast %411 : i32 to index
      %413 = memref.load %arg1[%412] : memref<256xf32, #tpu.memory_space<smem>>
      %c7_i32_261 = arith.constant 7 : i32
      %414 = arith.addi %410, %c7_i32_261 : i32
      %415 = arith.index_cast %414 : i32 to index
      %416 = memref.load %arg1[%415] : memref<256xf32, #tpu.memory_space<smem>>
      %c2_262 = arith.constant 2 : index
      %c0_263 = arith.constant 0 : index
      %c0_264 = arith.constant 0 : index
      %417 = vector.load %arg8[%c2_262, %c0_263, %c0_264] : memref<4x8x256xf32, #tpu.memory_space<vmem>>, vector<1x8x256xf32>
      %418 = vector.shape_cast %417 : vector<1x8x256xf32> to vector<8x256xf32>
      %c2_265 = arith.constant 2 : index
      %c0_266 = arith.constant 0 : index
      %c0_267 = arith.constant 0 : index
      %419 = vector.load %arg6[%c2_265, %c0_266, %c0_267] : memref<4x8x256xf32, #tpu.memory_space<vmem>>, vector<1x8x256xf32>
      %420 = vector.shape_cast %419 : vector<1x8x256xf32> to vector<8x256xf32>
      %cst_268 = arith.constant 2.000000e+00 : f32
      %421 = vector.broadcast %cst_268 : f32 to vector<8x256xf32>
      %422 = arith.mulf %421, %420 : vector<8x256xf32>
      %c1_269 = arith.constant 1 : index
      %c0_270 = arith.constant 0 : index
      %c0_271 = arith.constant 0 : index
      %423 = vector.load %arg6[%c1_269, %c0_270, %c0_271] : memref<4x8x256xf32, #tpu.memory_space<vmem>>, vector<1x8x256xf32>
      %424 = vector.shape_cast %423 : vector<1x8x256xf32> to vector<8x256xf32>
      %c3_272 = arith.constant 3 : index
      %c0_273 = arith.constant 0 : index
      %c0_274 = arith.constant 0 : index
      %425 = vector.load %arg6[%c3_272, %c0_273, %c0_274] : memref<4x8x256xf32, #tpu.memory_space<vmem>>, vector<1x8x256xf32>
      %426 = vector.shape_cast %425 : vector<1x8x256xf32> to vector<8x256xf32>
      %427 = arith.addf %424, %426 : vector<8x256xf32>
      %428 = arith.subf %422, %427 : vector<8x256xf32>
      %429 = vector.broadcast %413 : f32 to vector<8x256xf32>
      %430 = arith.mulf %429, %428 : vector<8x256xf32>
      %431 = arith.addf %418, %430 : vector<8x256xf32>
      %c2_275 = arith.constant 2 : index
      %c0_276 = arith.constant 0 : index
      %c0_277 = arith.constant 0 : index
      %432 = vector.load %arg8[%c2_275, %c0_276, %c0_277] : memref<4x8x256xf32, #tpu.memory_space<vmem>>, vector<1x8x256xf32>
      %433 = vector.shape_cast %432 : vector<1x8x256xf32> to vector<8x256xf32>
      %434 = vector.shape_cast %431 : vector<8x256xf32> to vector<1x8x256xf32>
      tpu.vector_store %arg8[%c2_275, %c0_276, %c0_277], %434 {strides = array<i32>} : memref<4x8x256xf32, #tpu.memory_space<vmem>>, vector<1x8x256xf32>,
      %c2_278 = arith.constant 2 : index
      %c0_279 = arith.constant 0 : index
      %c0_280 = arith.constant 0 : index
      %435 = vector.load %arg9[%c2_278, %c0_279, %c0_280] : memref<4x8x1xf32, #tpu.memory_space<vmem>>, vector<1x8x1xf32>
      %436 = vector.shape_cast %435 : vector<1x8x1xf32> to vector<8x1xf32>
      %c2_281 = arith.constant 2 : index
      %c0_282 = arith.constant 0 : index
      %c0_283 = arith.constant 0 : index
      %437 = vector.load %arg7[%c2_281, %c0_282, %c0_283] : memref<4x8x1xf32, #tpu.memory_space<vmem>>, vector<1x8x1xf32>
      %438 = vector.shape_cast %437 : vector<1x8x1xf32> to vector<8x1xf32>
      %cst_284 = arith.constant 2.000000e+00 : f32
      %439 = vector.broadcast %cst_284 : f32 to vector<8x1xf32>
      %440 = arith.mulf %439, %438 : vector<8x1xf32>
      %c1_285 = arith.constant 1 : index
      %c0_286 = arith.constant 0 : index
      %c0_287 = arith.constant 0 : index
      %441 = vector.load %arg7[%c1_285, %c0_286, %c0_287] : memref<4x8x1xf32, #tpu.memory_space<vmem>>, vector<1x8x1xf32>
      %442 = vector.shape_cast %441 : vector<1x8x1xf32> to vector<8x1xf32>
      %c3_288 = arith.constant 3 : index
      %c0_289 = arith.constant 0 : index
      %c0_290 = arith.constant 0 : index
      %443 = vector.load %arg7[%c3_288, %c0_289, %c0_290] : memref<4x8x1xf32, #tpu.memory_space<vmem>>, vector<1x8x1xf32>
      %444 = vector.shape_cast %443 : vector<1x8x1xf32> to vector<8x1xf32>
      %445 = arith.addf %442, %444 : vector<8x1xf32>
      %446 = arith.subf %440, %445 : vector<8x1xf32>
      %447 = vector.broadcast %416 : f32 to vector<8x1xf32>
      %448 = arith.mulf %447, %446 : vector<8x1xf32>
      %449 = arith.addf %436, %448 : vector<8x1xf32>
      %c2_291 = arith.constant 2 : index
      %c0_292 = arith.constant 0 : index
      %c0_293 = arith.constant 0 : index
      %450 = vector.load %arg9[%c2_291, %c0_292, %c0_293] : memref<4x8x1xf32, #tpu.memory_space<vmem>>, vector<1x8x1xf32>
      %451 = vector.shape_cast %450 : vector<1x8x1xf32> to vector<8x1xf32>
      %452 = vector.shape_cast %449 : vector<8x1xf32> to vector<1x8x1xf32>
      tpu.vector_store %arg9[%c2_291, %c0_292, %c0_293], %452 {strides = array<i32>} : memref<4x8x1xf32, #tpu.memory_space<vmem>>, vector<1x8x1xf32>,
      %c24_i32_294 = arith.constant 24 : i32
      %453 = arith.addi %11, %c24_i32_294 : i32
      %c6_i32_295 = arith.constant 6 : i32
      %454 = arith.addi %453, %c6_i32_295 : i32
      %455 = arith.index_cast %454 : i32 to index
      %456 = memref.load %arg1[%455] : memref<256xf32, #tpu.memory_space<smem>>
      %c7_i32_296 = arith.constant 7 : i32
      %457 = arith.addi %453, %c7_i32_296 : i32
      %458 = arith.index_cast %457 : i32 to index
      %459 = memref.load %arg1[%458] : memref<256xf32, #tpu.memory_space<smem>>
      %c3_297 = arith.constant 3 : index
      %c0_298 = arith.constant 0 : index
      %c0_299 = arith.constant 0 : index
      %460 = vector.load %arg8[%c3_297, %c0_298, %c0_299] : memref<4x8x256xf32, #tpu.memory_space<vmem>>, vector<1x8x256xf32>
      %461 = vector.shape_cast %460 : vector<1x8x256xf32> to vector<8x256xf32>
      %c3_300 = arith.constant 3 : index
      %c0_301 = arith.constant 0 : index
      %c0_302 = arith.constant 0 : index
      %462 = vector.load %arg6[%c3_300, %c0_301, %c0_302] : memref<4x8x256xf32, #tpu.memory_space<vmem>>, vector<1x8x256xf32>
      %463 = vector.shape_cast %462 : vector<1x8x256xf32> to vector<8x256xf32>
      %cst_303 = arith.constant 2.000000e+00 : f32
      %464 = vector.broadcast %cst_303 : f32 to vector<8x256xf32>
      %465 = arith.mulf %464, %463 : vector<8x256xf32>
      %c2_304 = arith.constant 2 : index
      %c0_305 = arith.constant 0 : index
      %c0_306 = arith.constant 0 : index
      %466 = vector.load %arg6[%c2_304, %c0_305, %c0_306] : memref<4x8x256xf32, #tpu.memory_space<vmem>>, vector<1x8x256xf32>
      %467 = vector.shape_cast %466 : vector<1x8x256xf32> to vector<8x256xf32>
      %c0_307 = arith.constant 0 : index
      %c0_308 = arith.constant 0 : index
      %c0_309 = arith.constant 0 : index
      %468 = vector.load %arg6[%c0_307, %c0_308, %c0_309] : memref<4x8x256xf32, #tpu.memory_space<vmem>>, vector<1x8x256xf32>
      %469 = vector.shape_cast %468 : vector<1x8x256xf32> to vector<8x256xf32>
      %470 = arith.addf %467, %469 : vector<8x256xf32>
      %471 = arith.subf %465, %470 : vector<8x256xf32>
      %472 = vector.broadcast %456 : f32 to vector<8x256xf32>
      %473 = arith.mulf %472, %471 : vector<8x256xf32>
      %474 = arith.addf %461, %473 : vector<8x256xf32>
      %c3_310 = arith.constant 3 : index
      %c0_311 = arith.constant 0 : index
      %c0_312 = arith.constant 0 : index
      %475 = vector.load %arg8[%c3_310, %c0_311, %c0_312] : memref<4x8x256xf32, #tpu.memory_space<vmem>>, vector<1x8x256xf32>
      %476 = vector.shape_cast %475 : vector<1x8x256xf32> to vector<8x256xf32>
      %477 = vector.shape_cast %474 : vector<8x256xf32> to vector<1x8x256xf32>
      tpu.vector_store %arg8[%c3_310, %c0_311, %c0_312], %477 {strides = array<i32>} : memref<4x8x256xf32, #tpu.memory_space<vmem>>, vector<1x8x256xf32>,
      %c3_313 = arith.constant 3 : index
      %c0_314 = arith.constant 0 : index
      %c0_315 = arith.constant 0 : index
      %478 = vector.load %arg9[%c3_313, %c0_314, %c0_315] : memref<4x8x1xf32, #tpu.memory_space<vmem>>, vector<1x8x1xf32>
      %479 = vector.shape_cast %478 : vector<1x8x1xf32> to vector<8x1xf32>
      %c3_316 = arith.constant 3 : index
      %c0_317 = arith.constant 0 : index
      %c0_318 = arith.constant 0 : index
      %480 = vector.load %arg7[%c3_316, %c0_317, %c0_318] : memref<4x8x1xf32, #tpu.memory_space<vmem>>, vector<1x8x1xf32>
      %481 = vector.shape_cast %480 : vector<1x8x1xf32> to vector<8x1xf32>
      %cst_319 = arith.constant 2.000000e+00 : f32
      %482 = vector.broadcast %cst_319 : f32 to vector<8x1xf32>
      %483 = arith.mulf %482, %481 : vector<8x1xf32>
      %c2_320 = arith.constant 2 : index
      %c0_321 = arith.constant 0 : index
      %c0_322 = arith.constant 0 : index
      %484 = vector.load %arg7[%c2_320, %c0_321, %c0_322] : memref<4x8x1xf32, #tpu.memory_space<vmem>>, vector<1x8x1xf32>
      %485 = vector.shape_cast %484 : vector<1x8x1xf32> to vector<8x1xf32>
      %c0_323 = arith.constant 0 : index
      %c0_324 = arith.constant 0 : index
      %c0_325 = arith.constant 0 : index
      %486 = vector.load %arg7[%c0_323, %c0_324, %c0_325] : memref<4x8x1xf32, #tpu.memory_space<vmem>>, vector<1x8x1xf32>
      %487 = vector.shape_cast %486 : vector<1x8x1xf32> to vector<8x1xf32>
      %488 = arith.addf %485, %487 : vector<8x1xf32>
      %489 = arith.subf %483, %488 : vector<8x1xf32>
      %490 = vector.broadcast %459 : f32 to vector<8x1xf32>
      %491 = arith.mulf %490, %489 : vector<8x1xf32>
      %492 = arith.addf %479, %491 : vector<8x1xf32>
      %c3_326 = arith.constant 3 : index
      %c0_327 = arith.constant 0 : index
      %c0_328 = arith.constant 0 : index
      %493 = vector.load %arg9[%c3_326, %c0_327, %c0_328] : memref<4x8x1xf32, #tpu.memory_space<vmem>>, vector<1x8x1xf32>
      %494 = vector.shape_cast %493 : vector<1x8x1xf32> to vector<8x1xf32>
      %495 = vector.shape_cast %492 : vector<8x1xf32> to vector<1x8x1xf32>
      tpu.vector_store %arg9[%c3_326, %c0_327, %c0_328], %495 {strides = array<i32>} : memref<4x8x1xf32, #tpu.memory_space<vmem>>, vector<1x8x1xf32>,
    }
    %c8_i32_13 = arith.constant 8 : i32
    return
  }
  func.func @transform_0(%arg0: i32) -> i32 {
    %c0_i32 = arith.constant 0 : i32
    %c0_i32_0 = arith.constant 0 : i32
    return %c0_i32 : i32
  }
  func.func @transform_1(%arg0: i32) -> (i32, i32, i32) {
    %c0_i32 = arith.constant 0 : i32
    %c0_i32_0 = arith.constant 0 : i32
    %c0_i32_1 = arith.constant 0 : i32
    return %c0_i32, %arg0, %c0_i32_0 : i32, i32, i32
  }
  func.func @transform_2(%arg0: i32) -> (i32, i32, i32) {
    %c0_i32 = arith.constant 0 : i32
    %c0_i32_0 = arith.constant 0 : i32
    %c0_i32_1 = arith.constant 0 : i32
    return %c0_i32, %arg0, %c0_i32_0 : i32, i32, i32
  }
  func.func @transform_3(%arg0: i32) -> (i32, i32, i32) {
    %c0_i32 = arith.constant 0 : i32
    %c0_i32_0 = arith.constant 0 : i32
    %c0_i32_1 = arith.constant 0 : i32
    return %c0_i32, %arg0, %c0_i32_0 : i32, i32, i32
  }
  func.func @transform_5(%arg0: i32) -> (i32, i32, i32) {
    %c0_i32 = arith.constant 0 : i32
    %c0_i32_0 = arith.constant 0 : i32
    %c0_i32_1 = arith.constant 0 : i32
    return %c0_i32, %arg0, %c0_i32_0 : i32, i32, i32
  }
  func.func @transform_6(%arg0: i32) -> (i32, i32, i32) {
    %c0_i32 = arith.constant 0 : i32
    %c0_i32_0 = arith.constant 0 : i32
    %c0_i32_1 = arith.constant 0 : i32
    return %c0_i32, %arg0, %c0_i32_0 : i32, i32, i32
  }
}

</mosaic_0001>

<llo_original>
// kernel: tpu_custom_call.1
$region0: #{tpu_custom_call.1}
  #allocation0 [shape = 'u32[]', space=smem, size = 0x4, offset = 0x4, fixed_abs, tag = 'smem constant byte address 0x4 - core index']
  #allocation1 [shape = 'u32[144,128]{1,0:T(1,128)}', space=vmem, size = 0x12000, scoped, tag = 'internal scratch']
  #allocation2 [shape = 'f32[4,8,256]{2,1,0:T(8,128)}', space=vmem, size = 0x8000, scoped, tag = 'scratch operand']
  #allocation3 [shape = 'f32[4,8,1]{2,1,0:T(8,128)}', space=vmem, size = 0x4000, scoped, tag = 'scratch operand']
  #allocation13 [shape = 's32[]', space=sflag, size = 0x4, offset = 0, fixed_abs, tag = 'sflag constant byte address 0x0 - dummy sync flag']
  %s0 = inlined_call_operand.vmem [shape: f32[256], index: 0, kind: input, shape index: {}]
  %s1 = inlined_call_operand.vmem [shape: f32[4,16,256], index: 1, kind: input, shape index: {}]
  %s2 = inlined_call_operand.vmem [shape: f32[4,16,1], index: 2, kind: input, shape index: {}]
  %s3 = inlined_call_operand.vmem [shape: f32[4,16,1], index: 3, kind: input, shape index: {}]
  %s4 = inlined_call_operand.hbm [shape: f32[4,16,256], index: 4, kind: input, shape index: {}]
  %s5 = inlined_call_operand.hbm [shape: f32[4,16,256], index: 5, kind: output, shape index: {0}]
  %s6 = inlined_call_operand.vmem [shape: f32[4,16,1], index: 6, kind: output, shape index: {1}]
  %7 = xla_tuple %s5, %s6
  %s8 = sld [smem:[#allocation0]]
  $region202: #{tpu_custom_call.1} parent=0
    _
  %s10 = ssub.s32 1, %s8
  %s11 = scalar_select 0, %s10, %s8
  $region1: #{tpu_custom_call.1} parent=0
    #allocation4 [shape = 'u8[1024]{0}', space=smem, size = 0x400, scoped, tag = 'input window, operand 0, single buffered']
    #allocation5 [shape = 's32[2]{0}', space=sflag, size = 0x8, scoped, tag = 'scoped memory for tpu_custom_call.1']
    #allocation6 [shape = 's32[2]{0}', space=sflag, size = 0x8, scoped, tag = 'scoped memory for tpu_custom_call.1']
    #allocation7 [shape = 'u8[65536]{0}', space=vmem, size = 0x10000, scoped, tag = 'input window, operand 1']
    #allocation8 [shape = 'u8[32768]{0}', space=vmem, size = 0x8000, scoped, tag = 'input window, operand 2']
    #allocation9 [shape = 'u8[32768]{0}', space=vmem, size = 0x8000, scoped, tag = 'input window, operand 3']
    #allocation10 [shape = 'u8[65536]{0}', space=vmem, size = 0x10000, scoped, tag = 'output window, operand 0']
    #allocation11 [shape = 'u8[32768]{0}', space=vmem, size = 0x8000, scoped, tag = 'output window, operand 1']
    %12 = vsyncpa [#allocation6], 0
    %13 = vsyncpa [#allocation5], 0
    %s14 = scalar_lea.sflag [#allocation5], 1
    %15 = vsyncpa %s14, 0
    loop: start=0, step=1, limit=4
    $region2: #{tpu_custom_call.1} parent=1 // loop_pre_header
      _
    $region3: #{tpu_custom_call.1} parent=1 // loop_header
      %s17 = sphi 0, %s21
      %p18 = scmp.ge.s32.totalorder %s17, 4
      %s25 = sphi 0, %s25
      %s27 = sphi 0, %s25
      %s28 = sphi 0, %s27
      %s42 = sphi 0, %s28
      %s48 = sphi 0, %s50
      %s51 = sphi 0, %s48
      %s52 = sphi 0, %s51
      %s68 = sphi 0, %s52
      %s74 = sphi 0, %s76
      %s77 = sphi 0, %s74
      %s78 = sphi 0, %s77
      %s94 = sphi 0, %s78
      %s100 = sphi 0, %s102
      %s103 = sphi 0, %s100
      %s104 = sphi 0, %s103
      %s120 = sphi 0, %s104
      %s126 = sphi 0, %s128
      %s129 = sphi 0, %s126
      %s130 = sphi 0, %s129
      %s146 = sphi 0, %s130
      %s152 = sphi 0, %s154
      %s155 = sphi 0, %s152
      %s156 = sphi 0, %s155
      %s172 = sphi 0, %s156
    $region4: #{tpu_custom_call.1} parent=1 // loop_header_branch
      %20 = sbr.rel (%p18) target = $region8
    $region5: #{tpu_custom_call.1} parent=1 // loop_body
      %s22 = ssub.s32 %s17, 1
      %s23 = ssub.s32 %s17, 2
      %s24 = sadd.s32 %s17, 1
      %s26 = sadd.s32 %s25, 1
      %p29 = scmp.eq.s32.totalorder %s17, 1
      %p30 = scmp.ne.s32.totalorder %s25, %s27
      %p31 = scmp.eq.s32.totalorder %s17, 0
      %p32 = por %p30, %p31
      %p33 = scmp.ne.s32.totalorder %s25, %s27
      %p34 = scmp.eq.s32.totalorder %s22, 1
      %p35 = por %p33, %p34
      %p36 = scmp.ne.s32.totalorder %s27, %s28
      %p37 = scmp.eq.s32.totalorder %s22, 0
      %p38 = por %p36, %p37
      %p39 = scmp.ne.s32.totalorder %s27, %s28
      %p40 = scmp.eq.s32.totalorder %s23, 1
      %p41 = por %p39, %p40
      %p43 = scmp.ne.s32.totalorder %s28, %s42
      %p44 = scmp.eq.s32.totalorder %s23, 0
      %p45 = por %p43, %p44
      %s46 = ssub.s32 %s17, %s24
      %p47 = scmp.eq.s32.totalorder %s46, 0
      %s49 = sadd.s32 %s48, 1
      %s50 = scalar_select %p47, %s48, %s49
      %p53 = pneg %p47
      %p54 = scmp.eq.s32.totalorder %s17, 1
      %p55 = por %p53, %p54
      %p56 = scmp.ne.s32.totalorder %s48, %s51
      %p57 = scmp.eq.s32.totalorder %s17, 0
      %p58 = por %p56, %p57
      %p59 = scmp.ne.s32.totalorder %s48, %s51
      %p60 = scmp.eq.s32.totalorder %s22, 1
      %p61 = por %p59, %p60
      %p62 = scmp.ne.s32.totalorder %s51, %s52
      %p63 = scmp.eq.s32.totalorder %s22, 0
      %p64 = por %p62, %p63
      %p65 = scmp.ne.s32.totalorder %s51, %s52
      %p66 = scmp.eq.s32.totalorder %s23, 1
      %p67 = por %p65, %p66
      %p69 = scmp.ne.s32.totalorder %s52, %s68
      %p70 = scmp.eq.s32.totalorder %s23, 0
      %p71 = por %p69, %p70
      %s72 = ssub.s32 %s17, %s24
      %p73 = scmp.eq.s32.totalorder %s72, 0
      %s75 = sadd.s32 %s74, 1
      %s76 = scalar_select %p73, %s74, %s75
      %p79 = pneg %p73
      %p80 = scmp.eq.s32.totalorder %s17, 1
      %p81 = por %p79, %p80
      %p82 = scmp.ne.s32.totalorder %s74, %s77
      %p83 = scmp.eq.s32.totalorder %s17, 0
      %p84 = por %p82, %p83
      %p85 = scmp.ne.s32.totalorder %s74, %s77
      %p86 = scmp.eq.s32.totalorder %s22, 1
      %p87 = por %p85, %p86
      %p88 = scmp.ne.s32.totalorder %s77, %s78
      %p89 = scmp.eq.s32.totalorder %s22, 0
      %p90 = por %p88, %p89
      %p91 = scmp.ne.s32.totalorder %s77, %s78
      %p92 = scmp.eq.s32.totalorder %s23, 1
      %p93 = por %p91, %p92
      %p95 = scmp.ne.s32.totalorder %s78, %s94
      %p96 = scmp.eq.s32.totalorder %s23, 0
      %p97 = por %p95, %p96
      %s98 = ssub.s32 %s17, %s24
      %p99 = scmp.eq.s32.totalorder %s98, 0
      %s101 = sadd.s32 %s100, 1
      %s102 = scalar_select %p99, %s100, %s101
      %p105 = pneg %p99
      %p106 = scmp.eq.s32.totalorder %s17, 1
      %p107 = por %p105, %p106
      %p108 = scmp.ne.s32.totalorder %s100, %s103
      %p109 = scmp.eq.s32.totalorder %s17, 0
      %p110 = por %p108, %p109
      %p111 = scmp.ne.s32.totalorder %s100, %s103
      %p112 = scmp.eq.s32.totalorder %s22, 1
      %p113 = por %p111, %p112
      %p114 = scmp.ne.s32.totalorder %s103, %s104
      %p115 = scmp.eq.s32.totalorder %s22, 0
      %p116 = por %p114, %p115
      %p117 = scmp.ne.s32.totalorder %s103, %s104
      %p118 = scmp.eq.s32.totalorder %s23, 1
      %p119 = por %p117, %p118
      %p121 = scmp.ne.s32.totalorder %s104, %s120
      %p122 = scmp.eq.s32.totalorder %s23, 0
      %p123 = por %p121, %p122
      %s124 = ssub.s32 %s17, %s24
      %p125 = scmp.eq.s32.totalorder %s124, 0
      %s127 = sadd.s32 %s126, 1
      %s128 = scalar_select %p125, %s126, %s127
      %p131 = pneg %p125
      %p132 = scmp.eq.s32.totalorder %s17, 1
      %p133 = por %p131, %p132
      %p134 = scmp.ne.s32.totalorder %s126, %s129
      %p135 = scmp.eq.s32.totalorder %s17, 0
      %p136 = por %p134, %p135
      %p137 = scmp.ne.s32.totalorder %s126, %s129
      %p138 = scmp.eq.s32.totalorder %s22, 1
      %p139 = por %p137, %p138
      %p140 = scmp.ne.s32.totalorder %s129, %s130
      %p141 = scmp.eq.s32.totalorder %s22, 0
      %p142 = por %p140, %p141
      %p143 = scmp.ne.s32.totalorder %s129, %s130
      %p144 = scmp.eq.s32.totalorder %s23, 1
      %p145 = por %p143, %p144
      %p147 = scmp.ne.s32.totalorder %s130, %s146
      %p148 = scmp.eq.s32.totalorder %s23, 0
      %p149 = por %p147, %p148
      %s150 = ssub.s32 %s17, %s24
      %p151 = scmp.eq.s32.totalorder %s150, 0
      %s153 = sadd.s32 %s152, 1
      %s154 = scalar_select %p151, %s152, %s153
      %p157 = pneg %p151
      %p158 = scmp.eq.s32.totalorder %s17, 1
      %p159 = por %p157, %p158
      %p160 = scmp.ne.s32.totalorder %s152, %s155
      %p161 = scmp.eq.s32.totalorder %s17, 0
      %p162 = por %p160, %p161
      %p163 = scmp.ne.s32.totalorder %s152, %s155
      %p164 = scmp.eq.s32.totalorder %s22, 1
      %p165 = por %p163, %p164
      %p166 = scmp.ne.s32.totalorder %s155, %s156
      %p167 = scmp.eq.s32.totalorder %s22, 0
      %p168 = por %p166, %p167
      %p169 = scmp.ne.s32.totalorder %s155, %s156
      %p170 = scmp.eq.s32.totalorder %s23, 1
      %p171 = por %p169, %p170
      %p173 = scmp.ne.s32.totalorder %s156, %s172
      %p174 = scmp.eq.s32.totalorder %s23, 0
      %p175 = por %p173, %p174
      %p176 = scmp.le.s32.totalorder 1, %s17
      %p177 = scmp.lt.s32.totalorder %s17, 3
      %p178 = pnand %p176, %p177
      %p179 = pneg %p178
      // Predicated region
      $region9: #{tpu_custom_call.1} parent=5 // pred_check
        _
      $region10: #{tpu_custom_call.1} parent=5 // pred_check_branch
        %181 = sbr.rel (%p178) target = $region12
      $region11: #{tpu_custom_call.1} parent=5 // pred_region
        %s182 = ssub.s32 %s17, 1
        // Predicated region
        $region13: #{tpu_custom_call.1} parent=11 // pred_check
          %p183 = pneg %p38
        $region14: #{tpu_custom_call.1} parent=11 // pred_check_branch
          %185 = sbr.rel (%p183) target = $region16
        $region15: #{tpu_custom_call.1} parent=11 // pred_region
          %s187 = ssub.s32 32, 32
          %188 = vsyncadd [#allocation6], %s187
          %s190 = sshll.u32 %s0, 4
          %s191 = int_to_ptr.vmem [resolvable:$true] %s190
          %193 = dma.vmem_to_smem %s191, 32, [#allocation4], [#allocation6]
        $region16: #{tpu_custom_call.1} parent=11 // pred_fallthru
          _
      $region12: #{tpu_custom_call.1} parent=5 // pred_fallthru
        _
      %p194 = scmp.lt.s32.totalorder %s17, 2
      // Predicated region
      $region17: #{tpu_custom_call.1} parent=5 // pred_check
        %p195 = pneg %p194
      $region18: #{tpu_custom_call.1} parent=5 // pred_check_branch
        %197 = sbr.rel (%p195) target = $region20
      $region19: #{tpu_custom_call.1} parent=5 // pred_region
        // Predicated region
        $region21: #{tpu_custom_call.1} parent=19 // pred_check
          %p198 = pneg %p58
        $region22: #{tpu_custom_call.1} parent=19 // pred_check_branch
          %200 = sbr.rel (%p198) target = $region24
        $region23: #{tpu_custom_call.1} parent=19 // pred_region
          %s201 = sand.u32 %s48, 1
          %s202 = sand.u32 %s48, 1
          %s203 = smul.addr %s202, 64
          %s204 = scalar_lea.vmem [#allocation7], %s203
          %s205 = smul.addr %s17, 2
          %s206 = smul.addr %s205, 8
          %s207 = scalar_lea.vmem %s1, %s206
          // Predicated region
          $region25: #{tpu_custom_call.1} parent=23 // pred_check
            _
          $region26: #{tpu_custom_call.1} parent=23 // pred_check_branch
            %209 = sbr.rel (0) target = $region28
          $region27: #{tpu_custom_call.1} parent=23 // pred_region
            // Predicated region
            $region29: #{tpu_custom_call.1} parent=27 // pred_check
              _
            $region30: #{tpu_custom_call.1} parent=27 // pred_check_branch
              %211 = sbr.rel (0) target = $region32
            $region31: #{tpu_custom_call.1} parent=27 // pred_region
              loop: start=0, step=1, limit=1
              $region33: #{tpu_custom_call.1} parent=31 // loop_pre_header
                _
              $region34: #{tpu_custom_call.1} parent=31 // loop_header
                %s213 = sphi 0, %s217
                %p214 = scmp.ge.s32.totalorder %s213, 1
                %s218 = sphi %s207, %s207
                %s219 = sphi %s204, %s204
              $region35: #{tpu_custom_call.1} parent=31 // loop_header_branch
                %216 = sbr.rel (%p214) target = $region39
              $region36: #{tpu_custom_call.1} parent=31 // loop_body
                %v220 = vld [vmem:[%s218] sm:$0xff]
                %221 = vst [vmem:[%s219] sm:$0xff] %v220
                %v222 = vld [vmem:[%s218 + $0x8] sm:$0xff]
                %223 = vst [vmem:[%s219 + $0x8] sm:$0xff] %v222
                %v224 = vld [vmem:[%s218 + $0x20] sm:$0xff]
                %225 = vst [vmem:[%s219 + $0x10] sm:$0xff] %v224
                %v226 = vld [vmem:[%s218 + $0x28] sm:$0xff]
                %227 = vst [vmem:[%s219 + $0x18] sm:$0xff] %v226
                %v228 = vld [vmem:[%s218 + $0x40] sm:$0xff]
                %229 = vst [vmem:[%s219 + $0x20] sm:$0xff] %v228
                %v230 = vld [vmem:[%s218 + $0x48] sm:$0xff]
                %231 = vst [vmem:[%s219 + $0x28] sm:$0xff] %v230
                %v232 = vld [vmem:[%s218 + $0x60] sm:$0xff]
                %233 = vst [vmem:[%s219 + $0x30] sm:$0xff] %v232
                %v234 = vld [vmem:[%s218 + $0x68] sm:$0xff]
                %235 = vst [vmem:[%s219 + $0x38] sm:$0xff] %v234
              $region37: #{tpu_custom_call.1} parent=31 // loop_footer
                %s217 = sadd.s32 1, %s213
              $region38: #{tpu_custom_call.1} parent=31 // loop_footer_branch
                %212 = sbr.rel target = $region34
              $region39: #{tpu_custom_call.1} parent=31 // loop_exit
                _
            $region32: #{tpu_custom_call.1} parent=27 // pred_fallthru
              _
            // Predicated region
            $region40: #{tpu_custom_call.1} parent=27 // pred_check
              _
            $region41: #{tpu_custom_call.1} parent=27 // pred_check_branch
              %237 = sbr.rel target = $region43
            $region42: #{tpu_custom_call.1} parent=27 // pred_region
              _
            $region43: #{tpu_custom_call.1} parent=27 // pred_fallthru
              _
          $region28: #{tpu_custom_call.1} parent=23 // pred_fallthru
            _
          %238 = vnop
        $region24: #{tpu_custom_call.1} parent=19 // pred_fallthru
          _
        // Predicated region
        $region44: #{tpu_custom_call.1} parent=19 // pred_check
          %p239 = pneg %p84
        $region45: #{tpu_custom_call.1} parent=19 // pred_check_branch
          %241 = sbr.rel (%p239) target = $region47
        $region46: #{tpu_custom_call.1} parent=19 // pred_region
          %s242 = sand.u32 %s74, 1
          %s243 = sand.u32 %s74, 1
          %s244 = smul.addr %s243, 32
          %s245 = scalar_lea.vmem [#allocation8], %s244
          %s246 = smul.addr %s17, 8
          %s247 = scalar_lea.vmem %s2, %s246
          // Predicated region
          $region48: #{tpu_custom_call.1} parent=46 // pred_check
            _
          $region49: #{tpu_custom_call.1} parent=46 // pred_check_branch
            %249 = sbr.rel (0) target = $region51
          $region50: #{tpu_custom_call.1} parent=46 // pred_region
            // Predicated region
            $region52: #{tpu_custom_call.1} parent=50 // pred_check
              _
            $region53: #{tpu_custom_call.1} parent=50 // pred_check_branch
              %251 = sbr.rel (0) target = $region55
            $region54: #{tpu_custom_call.1} parent=50 // pred_region
              // Predicated region
              $region67: #{tpu_custom_call.1} parent=54 // pred_check
                _
              $region68: #{tpu_custom_call.1} parent=54 // pred_check_branch
                %272 = sbr.rel (0) target = $region70
              $region69: #{tpu_custom_call.1} parent=54 // pred_region
                loop: start=0, step=1, limit=1
                $region71: #{tpu_custom_call.1} parent=69 // loop_pre_header
                  _
                $region72: #{tpu_custom_call.1} parent=69 // loop_header
                  %s274 = sphi 0, %s278
                  %p275 = scmp.ge.s32.totalorder %s274, 1
                  %s279 = sphi %s247, %s247
                  %s280 = sphi %s245, %s245
                $region73: #{tpu_custom_call.1} parent=69 // loop_header_branch
                  %277 = sbr.rel (%p275) target = $region77
                $region74: #{tpu_custom_call.1} parent=69 // loop_body
                  %v281 = vld [vmem:[%s279] sm:$0xff]
                  %282 = vst [vmem:[%s280] sm:$0xff] %v281
                  %v283 = vld [vmem:[%s279 + $0x10] sm:$0xff]
                  %284 = vst [vmem:[%s280 + $0x8] sm:$0xff] %v283
                  %v285 = vld [vmem:[%s279 + $0x20] sm:$0xff]
                  %286 = vst [vmem:[%s280 + $0x10] sm:$0xff] %v285
                  %v287 = vld [vmem:[%s279 + $0x30] sm:$0xff]
                  %288 = vst [vmem:[%s280 + $0x18] sm:$0xff] %v287
                $region75: #{tpu_custom_call.1} parent=69 // loop_footer
                  %s278 = sadd.s32 1, %s274
                $region76: #{tpu_custom_call.1} parent=69 // loop_footer_branch
                  %273 = sbr.rel target = $region72
                $region77: #{tpu_custom_call.1} parent=69 // loop_exit
                  _
              $region70: #{tpu_custom_call.1} parent=54 // pred_fallthru
                _
              // Predicated region
              $region78: #{tpu_custom_call.1} parent=54 // pred_check
                _
              $region79: #{tpu_custom_call.1} parent=54 // pred_check_branch
                %290 = sbr.rel target = $region81
              $region80: #{tpu_custom_call.1} parent=54 // pred_region
                _
              $region81: #{tpu_custom_call.1} parent=54 // pred_fallthru
                _
            $region55: #{tpu_custom_call.1} parent=50 // pred_fallthru
              _
            // Predicated region
            $region56: #{tpu_custom_call.1} parent=50 // pred_check
              _
            $region57: #{tpu_custom_call.1} parent=50 // pred_check_branch
              %253 = sbr.rel target = $region59
            $region58: #{tpu_custom_call.1} parent=50 // pred_region
              loop: start=0, step=1, limit=1
              $region60: #{tpu_custom_call.1} parent=58 // loop_pre_header
                _
              $region61: #{tpu_custom_call.1} parent=58 // loop_header
                %s256 = sphi 0, %s260
                %p257 = scmp.ge.s32.totalorder %s256, 1
                %s261 = sphi %s247, %s247
                %s262 = sphi %s245, %s245
              $region62: #{tpu_custom_call.1} parent=58 // loop_header_branch
                %259 = sbr.rel (%p257) target = $region66
              $region63: #{tpu_custom_call.1} parent=58 // loop_body
                %v263 = vld [vmem:[%s261] sm:$0xff]
                %264 = vst [vmem:[%s262] sm:$0xff] %v263
                %v265 = vld [vmem:[%s261 + $0x10] sm:$0xff]
                %266 = vst [vmem:[%s262 + $0x8] sm:$0xff] %v265
                %v267 = vld [vmem:[%s261 + $0x20] sm:$0xff]
                %268 = vst [vmem:[%s262 + $0x10] sm:$0xff] %v267
                %v269 = vld [vmem:[%s261 + $0x30] sm:$0xff]
                %270 = vst [vmem:[%s262 + $0x18] sm:$0xff] %v269
              $region64: #{tpu_custom_call.1} parent=58 // loop_footer
                %s260 = sadd.s32 1, %s256
              $region65: #{tpu_custom_call.1} parent=58 // loop_footer_branch
                %255 = sbr.rel target = $region61
              $region66: #{tpu_custom_call.1} parent=58 // loop_exit
                _
            $region59: #{tpu_custom_call.1} parent=50 // pred_fallthru
              _
          $region51: #{tpu_custom_call.1} parent=46 // pred_fallthru
            _
          %291 = vnop
        $region47: #{tpu_custom_call.1} parent=19 // pred_fallthru
          _
        // Predicated region
        $region82: #{tpu_custom_call.1} parent=19 // pred_check
          %p292 = pneg %p110
        $region83: #{tpu_custom_call.1} parent=19 // pred_check_branch
          %294 = sbr.rel (%p292) target = $region85
        $region84: #{tpu_custom_call.1} parent=19 // pred_region
          %s295 = sand.u32 %s100, 1
          %s296 = sand.u32 %s100, 1
          %s297 = smul.addr %s296, 32
          %s298 = scalar_lea.vmem [#allocation9], %s297
          %s299 = smul.addr %s17, 8
          %s300 = scalar_lea.vmem %s3, %s299
          // Predicated region
          $region86: #{tpu_custom_call.1} parent=84 // pred_check
            _
          $region87: #{tpu_custom_call.1} parent=84 // pred_check_branch
            %302 = sbr.rel (0) target = $region89
          $region88: #{tpu_custom_call.1} parent=84 // pred_region
            // Predicated region
            $region90: #{tpu_custom_call.1} parent=88 // pred_check
              _
            $region91: #{tpu_custom_call.1} parent=88 // pred_check_branch
              %304 = sbr.rel (0) target = $region93
            $region92: #{tpu_custom_call.1} parent=88 // pred_region
              // Predicated region
              $region105: #{tpu_custom_call.1} parent=92 // pred_check
                _
              $region106: #{tpu_custom_call.1} parent=92 // pred_check_branch
                %325 = sbr.rel (0) target = $region108
              $region107: #{tpu_custom_call.1} parent=92 // pred_region
                loop: start=0, step=1, limit=1
                $region109: #{tpu_custom_call.1} parent=107 // loop_pre_header
                  _
                $region110: #{tpu_custom_call.1} parent=107 // loop_header
                  %s327 = sphi 0, %s331
                  %p328 = scmp.ge.s32.totalorder %s327, 1
                  %s332 = sphi %s300, %s300
                  %s333 = sphi %s298, %s298
                $region111: #{tpu_custom_call.1} parent=107 // loop_header_branch
                  %330 = sbr.rel (%p328) target = $region115
                $region112: #{tpu_custom_call.1} parent=107 // loop_body
                  %v334 = vld [vmem:[%s332] sm:$0xff]
                  %335 = vst [vmem:[%s333] sm:$0xff] %v334
                  %v336 = vld [vmem:[%s332 + $0x10] sm:$0xff]
                  %337 = vst [vmem:[%s333 + $0x8] sm:$0xff] %v336
                  %v338 = vld [vmem:[%s332 + $0x20] sm:$0xff]
                  %339 = vst [vmem:[%s333 + $0x10] sm:$0xff] %v338
                  %v340 = vld [vmem:[%s332 + $0x30] sm:$0xff]
                  %341 = vst [vmem:[%s333 + $0x18] sm:$0xff] %v340
                $region113: #{tpu_custom_call.1} parent=107 // loop_footer
                  %s331 = sadd.s32 1, %s327
                $region114: #{tpu_custom_call.1} parent=107 // loop_footer_branch
                  %326 = sbr.rel target = $region110
                $region115: #{tpu_custom_call.1} parent=107 // loop_exit
                  _
              $region108: #{tpu_custom_call.1} parent=92 // pred_fallthru
                _
              // Predicated region
              $region116: #{tpu_custom_call.1} parent=92 // pred_check
                _
              $region117: #{tpu_custom_call.1} parent=92 // pred_check_branch
                %343 = sbr.rel target = $region119
              $region118: #{tpu_custom_call.1} parent=92 // pred_region
                _
              $region119: #{tpu_custom_call.1} parent=92 // pred_fallthru
                _
            $region93: #{tpu_custom_call.1} parent=88 // pred_fallthru
              _
            // Predicated region
            $region94: #{tpu_custom_call.1} parent=88 // pred_check
              _
            $region95: #{tpu_custom_call.1} parent=88 // pred_check_branch
              %306 = sbr.rel target = $region97
            $region96: #{tpu_custom_call.1} parent=88 // pred_region
              loop: start=0, step=1, limit=1
              $region98: #{tpu_custom_call.1} parent=96 // loop_pre_header
                _
              $region99: #{tpu_custom_call.1} parent=96 // loop_header
                %s309 = sphi 0, %s313
                %p310 = scmp.ge.s32.totalorder %s309, 1
                %s314 = sphi %s300, %s300
                %s315 = sphi %s298, %s298
              $region100: #{tpu_custom_call.1} parent=96 // loop_header_branch
                %312 = sbr.rel (%p310) target = $region104
              $region101: #{tpu_custom_call.1} parent=96 // loop_body
                %v316 = vld [vmem:[%s314] sm:$0xff]
                %317 = vst [vmem:[%s315] sm:$0xff] %v316
                %v318 = vld [vmem:[%s314 + $0x10] sm:$0xff]
                %319 = vst [vmem:[%s315 + $0x8] sm:$0xff] %v318
                %v320 = vld [vmem:[%s314 + $0x20] sm:$0xff]
                %321 = vst [vmem:[%s315 + $0x10] sm:$0xff] %v320
                %v322 = vld [vmem:[%s314 + $0x30] sm:$0xff]
                %323 = vst [vmem:[%s315 + $0x18] sm:$0xff] %v322
              $region102: #{tpu_custom_call.1} parent=96 // loop_footer
                %s313 = sadd.s32 1, %s309
              $region103: #{tpu_custom_call.1} parent=96 // loop_footer_branch
                %308 = sbr.rel target = $region99
              $region104: #{tpu_custom_call.1} parent=96 // loop_exit
                _
            $region97: #{tpu_custom_call.1} parent=88 // pred_fallthru
              _
          $region89: #{tpu_custom_call.1} parent=84 // pred_fallthru
            _
          %344 = vnop
        $region85: #{tpu_custom_call.1} parent=19 // pred_fallthru
          _
      $region20: #{tpu_custom_call.1} parent=5 // pred_fallthru
        _
      %p345 = scmp.le.s32.totalorder 1, %s17
      %p346 = scmp.lt.s32.totalorder %s17, 3
      %p347 = pnand %p345, %p346
      %p348 = pneg %p347
      // Predicated region
      $region120: #{tpu_custom_call.1} parent=5 // pred_check
        _
      $region121: #{tpu_custom_call.1} parent=5 // pred_check_branch
        %350 = sbr.rel (%p347) target = $region123
      $region122: #{tpu_custom_call.1} parent=5 // pred_region
        %s351 = ssub.s32 %s17, 1
        // Predicated region
        $region124: #{tpu_custom_call.1} parent=122 // pred_check
          %p352 = pneg %p38
        $region125: #{tpu_custom_call.1} parent=122 // pred_check_branch
          %354 = sbr.rel (%p352) target = $region127
        $region126: #{tpu_custom_call.1} parent=122 // pred_region
          %355 = dma.done [#allocation6], 32
        $region127: #{tpu_custom_call.1} parent=122 // pred_fallthru
          _
        %s356 = sand.u32 %s51, 1
        %s357 = sand.u32 %s51, 1
        %s358 = smul.addr %s357, 64
        %s359 = scalar_lea.vmem [#allocation7], %s358
        // Predicated region
        $region128: #{tpu_custom_call.1} parent=122 // pred_check
          %p360 = pneg %p64
        $region129: #{tpu_custom_call.1} parent=122 // pred_check_branch
          %362 = sbr.rel (%p360) target = $region131
        $region130: #{tpu_custom_call.1} parent=122 // pred_region
          _
        $region131: #{tpu_custom_call.1} parent=122 // pred_fallthru
          _
        %s363 = sand.u32 %s77, 1
        %s364 = sand.u32 %s77, 1
        %s365 = smul.addr %s364, 32
        %s366 = scalar_lea.vmem [#allocation8], %s365
        // Predicated region
        $region132: #{tpu_custom_call.1} parent=122 // pred_check
          %p367 = pneg %p90
        $region133: #{tpu_custom_call.1} parent=122 // pred_check_branch
          %369 = sbr.rel (%p367) target = $region135
        $region134: #{tpu_custom_call.1} parent=122 // pred_region
          _
        $region135: #{tpu_custom_call.1} parent=122 // pred_fallthru
          _
        %s370 = sand.u32 %s103, 1
        %s371 = sand.u32 %s103, 1
        %s372 = smul.addr %s371, 32
        %s373 = scalar_lea.vmem [#allocation9], %s372
        // Predicated region
        $region136: #{tpu_custom_call.1} parent=122 // pred_check
          %p374 = pneg %p116
        $region137: #{tpu_custom_call.1} parent=122 // pred_check_branch
          %376 = sbr.rel (%p374) target = $region139
        $region138: #{tpu_custom_call.1} parent=122 // pred_region
          _
        $region139: #{tpu_custom_call.1} parent=122 // pred_fallthru
          _
        %377 = sfence
        %p378 = pneg %p38
        %p379 = pneg %p35
        %s380 = sand.u32 %s51, 1
        %s381 = sand.u32 %s51, 1
        %s382 = smul.addr %s381, 64
        %s383 = scalar_lea.vmem [#allocation7], %s382
        %p384 = pneg %p64
        %p385 = pneg %p61
        %s386 = sand.u32 %s77, 1
        %s387 = sand.u32 %s77, 1
        %s388 = smul.addr %s387, 32
        %s389 = scalar_lea.vmem [#allocation8], %s388
        %p390 = pneg %p90
        %p391 = pneg %p87
        %s392 = sand.u32 %s103, 1
        %s393 = sand.u32 %s103, 1
        %s394 = smul.addr %s393, 32
        %s395 = scalar_lea.vmem [#allocation9], %s394
        %p396 = pneg %p116
        %p397 = pneg %p113
        %p398 = pneg %p142
        %p399 = pneg %p139
        %s400 = sand.u32 %s129, 1
        %s401 = scalar_lea.sflag [#allocation5], %s400
        %s402 = sand.u32 %s129, 1
        %s403 = smul.addr %s402, 64
        %s404 = scalar_lea.vmem [#allocation10], %s403
        %p405 = pneg %p168
        %p406 = pneg %p165
        %s407 = sand.u32 %s155, 1
        %s408 = sand.u32 %s155, 1
        %s409 = smul.addr %s408, 32
        %s410 = scalar_lea.vmem [#allocation11], %s409
        %s411 = smul.u32 %s22, 8
        $region140: #{tpu_custom_call.1} parent=122
          #allocation12 [shape = 's32[1]{0}', space=sflag, size = 0x4, scoped, tag = 'scoped memory for tpu_custom_call.1']
          %s412 = sshra.s32 %s411, 3
          %s413 = sand.u32 %s411, 7
          %s414 = smul.u32 %s412, 2
          %s415 = smul.addr %s414, 128
          %s416 = scalar_lea.hbm %s4, %s415
          %s418 = sshll.u32 %s404, 4
          %s419 = int_to_ptr.vmem [resolvable:$true] %s418
          %421 = dma.hbm_to_vmem [thread:$0]  %s416, 1024, %s419, [#allocation12], 512, 256, 16
          %s422 = smul.u32 8, 4
          %s423 = smul.u32 %s422, 1
          %s424 = smul.u32 %s423, 2
          %s425 = sshll.u32 %s424, 4
          %426 = dma.done [#allocation12], %s425
        %v427 = vld [vmem:[%s373] sm:$0xff]
        %v428 = vld [vmem:[%s373 + $0x8] sm:$0xff]
        %v429 = vld [vmem:[%s373 + $0x10] sm:$0xff]
        %v430 = vld [vmem:[%s373 + $0x18] sm:$0xff]
        %vm431 = vcmask 7168
        %432 = vst.msk [vmem:[%s410] sm:$0xff] %vm431, %v427
        %433 = vst.msk [vmem:[%s410 + $0x8] sm:$0xff] %vm431, %v428
        %434 = vst.msk [vmem:[%s410 + $0x10] sm:$0xff] %vm431, %v429
        %435 = vst.msk [vmem:[%s410 + $0x18] sm:$0xff] %vm431, %v430
        %436 = vst [vmem:[#allocation2] sm:$0xff] 0.0
        %437 = vst [vmem:[#allocation2 + $0x8] sm:$0xff] 0.0
        %438 = vst [vmem:[#allocation2 + $0x10] sm:$0xff] 0.0
        %439 = vst [vmem:[#allocation2 + $0x18] sm:$0xff] 0.0
        %440 = vst [vmem:[#allocation2 + $0x20] sm:$0xff] 0.0
        %441 = vst [vmem:[#allocation2 + $0x28] sm:$0xff] 0.0
        %442 = vst [vmem:[#allocation2 + $0x30] sm:$0xff] 0.0
        %443 = vst [vmem:[#allocation2 + $0x38] sm:$0xff] 0.0
        %444 = vst.msk [vmem:[#allocation3] sm:$0xff] %vm431, 0.0
        %445 = vst.msk [vmem:[#allocation3 + $0x8] sm:$0xff] %vm431, 0.0
        %446 = vst.msk [vmem:[#allocation3 + $0x10] sm:$0xff] %vm431, 0.0
        %447 = vst.msk [vmem:[#allocation3 + $0x18] sm:$0xff] %vm431, 0.0
        loop: start=0, step=1, limit=8
        $region141: #{tpu_custom_call.1} parent=122 // loop_pre_header
          _
        $region142: #{tpu_custom_call.1} parent=122 // loop_header
          %s449 = sphi 0, %s453
          %p450 = scmp.ge.s32.totalorder %s449, 8
        $region143: #{tpu_custom_call.1} parent=122 // loop_header_branch
          %452 = sbr.rel (%p450) target = $region147
        $region144: #{tpu_custom_call.1} parent=122 // loop_body
          %s454 = smul.u32 %s449, 32
          %s455 = sld [smem:[#allocation4 + %s454]]
          %s456 = sadd.s32 %s454, 1
          %s457 = sld [smem:[#allocation4 + %s456]]
          %s458 = sadd.s32 %s454, 2
          %s459 = sld [smem:[#allocation4 + %s458]]
          %s460 = sadd.s32 %s454, 3
          %s461 = sld [smem:[#allocation4 + %s460]]
          %s462 = sadd.s32 %s454, 4
          %s463 = sld [smem:[#allocation4 + %s462]]
          %s464 = sadd.s32 %s454, 5
          %s465 = sld [smem:[#allocation4 + %s464]]
          %v466 = vld [vmem:[%s359] sm:$0xff]
          %v467 = vld [vmem:[%s359 + $0x8] sm:$0xff]
          %v468 = vld [vmem:[%s404] sm:$0xff]
          %v469 = vld [vmem:[%s404 + $0x8] sm:$0xff]
          %v470 = vld [vmem:[%s410] sm:$0xff]
          %v471 = vld [vmem:[%s366] sm:$0xff]
          %v472 = vmul.f32 %v466, %v468
          %v473 = vmul.f32 %v467, %v469
          %v474 = vadd.f32 %v472, %v473
          %475 = vadd.xlane.f32.xlu0 %v474
          %v476 = vpop.xlane.xlu0 %475
          %v477 = vadd.f32 %v476, %v470
          %v478 = vsub.f32 %v477, %v471
          %s479 = scalar_lea.vmem %s404, 48 [#allocation10]
          %v480 = vld [vmem:[%s479] sm:$0xff]
          %v481 = vld [vmem:[%s479 + $0x8] sm:$0xff]
          %s482 = scalar_lea.vmem %s404, 16 [#allocation10]
          %v483 = vld [vmem:[%s482] sm:$0xff]
          %v484 = vld [vmem:[%s482 + $0x8] sm:$0xff]
          %v485 = vadd.f32 %v480, %v483
          %v486 = vadd.f32 %v481, %v484
          %s487 = scalar_lea.vmem %s410, 24 [#allocation11]
          %v488 = vld [vmem:[%s487] sm:$0xff]
          %s489 = scalar_lea.vmem %s410, 8 [#allocation11]
          %v490 = vld [vmem:[%s489] sm:$0xff]
          %v491 = vadd.f32 %v488, %v490
          %493 = vset.pattern.permute.xlu0 0
          %494 = vperm.xlu0 %493, %v478
          %v495 = vpop.permute.xlu0 %494
          %v497 = vmul.f32 %v466, %v495
          %v498 = vmul.f32 %v467, %v495
          %v499 = vstv %s459
          %v500 = vmul.f32 %v499, %v468
          %v501 = vmul.f32 %v499, %v469
          %v502 = vadd.f32 %v497, %v500
          %v503 = vadd.f32 %v498, %v501
          %v504 = vld [vmem:[#allocation2] sm:$0xff]
          %v505 = vld [vmem:[#allocation2 + $0x8] sm:$0xff]
          %v506 = vmul.f32 %v504, 2.0
          %v507 = vmul.f32 %v505, 2.0
          %v508 = vadd.f32 %v502, %v506
          %v509 = vadd.f32 %v503, %v507
          %v510 = vstv %s455
          %v511 = vmul.f32 %v510, %v485
          %v512 = vmul.f32 %v510, %v486
          %v513 = vsub.f32 %v508, %v511
          %v514 = vsub.f32 %v509, %v512
          %v515 = vstv %s463
          %v516 = vmul.f32 %v515, %v470
          %v517 = vadd.f32 %v478, %v516
          %v518 = vld [vmem:[#allocation3] sm:$0xff]
          %v519 = vmul.f32 %v518, 2.0
          %v520 = vadd.f32 %v517, %v519
          %v521 = vstv %s461
          %v522 = vmul.f32 %v521, %v491
          %v523 = vsub.f32 %v520, %v522
          %v524 = vstv %s457
          %v525 = vmul.f32 %v524, %v513
          %v526 = vmul.f32 %v524, %v514
          %v527 = vsub.f32 %v468, %v525
          %v528 = vsub.f32 %v469, %v526
          %529 = vst [vmem:[%s404] sm:$0xff] %v527
          %530 = vst [vmem:[%s404 + $0x8] sm:$0xff] %v528
          %v531 = vstv %s465
          %v532 = vmul.f32 %v531, %v523
          %v533 = vsub.f32 %v470, %v532
          %534 = vst.msk [vmem:[%s410] sm:$0xff] %vm431, %v533
          %s535 = sadd.s32 %s454, 16
          %s536 = sld [smem:[#allocation4 + %s535]]
          %s537 = sadd.s32 %s454, 17
          %s538 = sld [smem:[#allocation4 + %s537]]
          %s539 = sadd.s32 %s454, 18
          %s540 = sld [smem:[#allocation4 + %s539]]
          %s541 = sadd.s32 %s454, 19
          %s542 = sld [smem:[#allocation4 + %s541]]
          %s543 = sadd.s32 %s454, 20
          %s544 = sld [smem:[#allocation4 + %s543]]
          %s545 = sadd.s32 %s454, 21
          %s546 = sld [smem:[#allocation4 + %s545]]
          %s547 = scalar_lea.vmem %s359, 32 [#allocation7]
          %v548 = vld [vmem:[%s547] sm:$0xff]
          %v549 = vld [vmem:[%s547 + $0x8] sm:$0xff]
          %s550 = scalar_lea.vmem %s404, 32 [#allocation10]
          %v551 = vld [vmem:[%s550] sm:$0xff]
          %v552 = vld [vmem:[%s550 + $0x8] sm:$0xff]
          %s553 = scalar_lea.vmem %s410, 16 [#allocation11]
          %v554 = vld [vmem:[%s553] sm:$0xff]
          %s555 = scalar_lea.vmem %s366, 16 [#allocation8]
          %v556 = vld [vmem:[%s555] sm:$0xff]
          %v557 = vmul.f32 %v548, %v551
          %v558 = vmul.f32 %v549, %v552
          %v559 = vadd.f32 %v557, %v558
          %560 = vadd.xlane.f32.xlu0 %v559
          %v561 = vpop.xlane.xlu0 %560
          %v562 = vadd.f32 %v561, %v554
          %v563 = vsub.f32 %v562, %v556
          %v564 = vld [vmem:[%s482] sm:$0xff]
          %v565 = vld [vmem:[%s482 + $0x8] sm:$0xff]
          %v566 = vld [vmem:[%s479] sm:$0xff]
          %v567 = vld [vmem:[%s479 + $0x8] sm:$0xff]
          %v568 = vadd.f32 %v564, %v566
          %v569 = vadd.f32 %v565, %v567
          %v570 = vld [vmem:[%s489] sm:$0xff]
          %v571 = vld [vmem:[%s487] sm:$0xff]
          %v572 = vadd.f32 %v570, %v571
          %574 = vset.pattern.permute.xlu0 0
          %575 = vperm.xlu0 %574, %v563
          %v576 = vpop.permute.xlu0 %575
          %v578 = vmul.f32 %v548, %v576
          %v579 = vmul.f32 %v549, %v576
          %v580 = vstv %s540
          %v581 = vmul.f32 %v580, %v551
          %v582 = vmul.f32 %v580, %v552
          %v583 = vadd.f32 %v578, %v581
          %v584 = vadd.f32 %v579, %v582
          %s585 = scalar_lea.vmem [#allocation2], 32
          %v586 = vld [vmem:[%s585] sm:$0xff]
          %v587 = vld [vmem:[%s585 + $0x8] sm:$0xff]
          %v588 = vmul.f32 %v586, 2.0
          %v589 = vmul.f32 %v587, 2.0
          %v590 = vadd.f32 %v583, %v588
          %v591 = vadd.f32 %v584, %v589
          %v592 = vstv %s536
          %v593 = vmul.f32 %v592, %v568
          %v594 = vmul.f32 %v592, %v569
          %v595 = vsub.f32 %v590, %v593
          %v596 = vsub.f32 %v591, %v594
          %v597 = vstv %s544
          %v598 = vmul.f32 %v597, %v554
          %v599 = vadd.f32 %v563, %v598
          %s600 = scalar_lea.vmem [#allocation3], 16
          %v601 = vld [vmem:[%s600] sm:$0xff]
          %v602 = vmul.f32 %v601, 2.0
          %v603 = vadd.f32 %v599, %v602
          %v604 = vstv %s542
          %v605 = vmul.f32 %v604, %v572
          %v606 = vsub.f32 %v603, %v605
          %v607 = vstv %s538
          %v608 = vmul.f32 %v607, %v595
          %v609 = vmul.f32 %v607, %v596
          %v610 = vsub.f32 %v551, %v608
          %v611 = vsub.f32 %v552, %v609
          %612 = vst [vmem:[%s550] sm:$0xff] %v610
          %613 = vst [vmem:[%s550 + $0x8] sm:$0xff] %v611
          %v614 = vstv %s546
          %v615 = vmul.f32 %v614, %v606
          %v616 = vsub.f32 %v554, %v615
          %617 = vst.msk [vmem:[%s553] sm:$0xff] %vm431, %v616
          %s618 = sadd.s32 %s454, 8
          %s619 = sld [smem:[#allocation4 + %s618]]
          %s620 = sadd.s32 %s454, 9
          %s621 = sld [smem:[#allocation4 + %s620]]
          %s622 = sadd.s32 %s454, 10
          %s623 = sld [smem:[#allocation4 + %s622]]
          %s624 = sadd.s32 %s454, 11
          %s625 = sld [smem:[#allocation4 + %s624]]
          %s626 = sadd.s32 %s454, 12
          %s627 = sld [smem:[#allocation4 + %s626]]
          %s628 = sadd.s32 %s454, 13
          %s629 = sld [smem:[#allocation4 + %s628]]
          %s630 = scalar_lea.vmem %s359, 16 [#allocation7]
          %v631 = vld [vmem:[%s630] sm:$0xff]
          %v632 = vld [vmem:[%s630 + $0x8] sm:$0xff]
          %v633 = vld [vmem:[%s482] sm:$0xff]
          %v634 = vld [vmem:[%s482 + $0x8] sm:$0xff]
          %v635 = vld [vmem:[%s489] sm:$0xff]
          %s636 = scalar_lea.vmem %s366, 8 [#allocation8]
          %v637 = vld [vmem:[%s636] sm:$0xff]
          %v638 = vmul.f32 %v631, %v633
          %v639 = vmul.f32 %v632, %v634
          %v640 = vadd.f32 %v638, %v639
          %641 = vadd.xlane.f32.xlu0 %v640
          %v642 = vpop.xlane.xlu0 %641
          %v643 = vadd.f32 %v642, %v635
          %v644 = vsub.f32 %v643, %v637
          %v645 = vld [vmem:[%s404] sm:$0xff]
          %v646 = vld [vmem:[%s404 + $0x8] sm:$0xff]
          %v647 = vld [vmem:[%s550] sm:$0xff]
          %v648 = vld [vmem:[%s550 + $0x8] sm:$0xff]
          %v649 = vadd.f32 %v645, %v647
          %v650 = vadd.f32 %v646, %v648
          %v651 = vld [vmem:[%s410] sm:$0xff]
          %v652 = vld [vmem:[%s553] sm:$0xff]
          %v653 = vadd.f32 %v651, %v652
          %655 = vset.pattern.permute.xlu0 0
          %656 = vperm.xlu0 %655, %v644
          %v657 = vpop.permute.xlu0 %656
          %v659 = vmul.f32 %v631, %v657
          %v660 = vmul.f32 %v632, %v657
          %v661 = vstv %s623
          %v662 = vmul.f32 %v661, %v633
          %v663 = vmul.f32 %v661, %v634
          %v664 = vadd.f32 %v659, %v662
          %v665 = vadd.f32 %v660, %v663
          %s666 = scalar_lea.vmem [#allocation2], 16
          %v667 = vld [vmem:[%s666] sm:$0xff]
          %v668 = vld [vmem:[%s666 + $0x8] sm:$0xff]
          %v669 = vmul.f32 %v667, 2.0
          %v670 = vmul.f32 %v668, 2.0
          %v671 = vadd.f32 %v664, %v669
          %v672 = vadd.f32 %v665, %v670
          %v673 = vstv %s619
          %v674 = vmul.f32 %v673, %v649
          %v675 = vmul.f32 %v673, %v650
          %v676 = vsub.f32 %v671, %v674
          %v677 = vsub.f32 %v672, %v675
          %v678 = vstv %s627
          %v679 = vmul.f32 %v678, %v635
          %v680 = vadd.f32 %v644, %v679
          %s681 = scalar_lea.vmem [#allocation3], 8
          %v682 = vld [vmem:[%s681] sm:$0xff]
          %v683 = vmul.f32 %v682, 2.0
          %v684 = vadd.f32 %v680, %v683
          %v685 = vstv %s625
          %v686 = vmul.f32 %v685, %v653
          %v687 = vsub.f32 %v684, %v686
          %v688 = vstv %s621
          %v689 = vmul.f32 %v688, %v676
          %v690 = vmul.f32 %v688, %v677
          %v691 = vsub.f32 %v633, %v689
          %v692 = vsub.f32 %v634, %v690
          %693 = vst [vmem:[%s482] sm:$0xff] %v691
          %694 = vst [vmem:[%s482 + $0x8] sm:$0xff] %v692
          %v695 = vstv %s629
          %v696 = vmul.f32 %v695, %v687
          %v697 = vsub.f32 %v635, %v696
          %698 = vst.msk [vmem:[%s489] sm:$0xff] %vm431, %v697
          %s699 = sadd.s32 %s454, 24
          %s700 = sld [smem:[#allocation4 + %s699]]
          %s701 = sadd.s32 %s454, 25
          %s702 = sld [smem:[#allocation4 + %s701]]
          %s703 = sadd.s32 %s454, 26
          %s704 = sld [smem:[#allocation4 + %s703]]
          %s705 = sadd.s32 %s454, 27
          %s706 = sld [smem:[#allocation4 + %s705]]
          %s707 = sadd.s32 %s454, 28
          %s708 = sld [smem:[#allocation4 + %s707]]
          %s709 = sadd.s32 %s454, 29
          %s710 = sld [smem:[#allocation4 + %s709]]
          %s711 = scalar_lea.vmem %s359, 48 [#allocation7]
          %v712 = vld [vmem:[%s711] sm:$0xff]
          %v713 = vld [vmem:[%s711 + $0x8] sm:$0xff]
          %v714 = vld [vmem:[%s479] sm:$0xff]
          %v715 = vld [vmem:[%s479 + $0x8] sm:$0xff]
          %v716 = vld [vmem:[%s487] sm:$0xff]
          %s717 = scalar_lea.vmem %s366, 24 [#allocation8]
          %v718 = vld [vmem:[%s717] sm:$0xff]
          %v719 = vmul.f32 %v712, %v714
          %v720 = vmul.f32 %v713, %v715
          %v721 = vadd.f32 %v719, %v720
          %722 = vadd.xlane.f32.xlu0 %v721
          %v723 = vpop.xlane.xlu0 %722
          %v724 = vadd.f32 %v723, %v716
          %v725 = vsub.f32 %v724, %v718
          %v726 = vld [vmem:[%s550] sm:$0xff]
          %v727 = vld [vmem:[%s550 + $0x8] sm:$0xff]
          %v728 = vld [vmem:[%s404] sm:$0xff]
          %v729 = vld [vmem:[%s404 + $0x8] sm:$0xff]
          %v730 = vadd.f32 %v726, %v728
          %v731 = vadd.f32 %v727, %v729
          %v732 = vld [vmem:[%s553] sm:$0xff]
          %v733 = vld [vmem:[%s410] sm:$0xff]
          %v734 = vadd.f32 %v732, %v733
          %736 = vset.pattern.permute.xlu0 0
          %737 = vperm.xlu0 %736, %v725
          %v738 = vpop.permute.xlu0 %737
          %v740 = vmul.f32 %v712, %v738
          %v741 = vmul.f32 %v713, %v738
          %v742 = vstv %s704
          %v743 = vmul.f32 %v742, %v714
          %v744 = vmul.f32 %v742, %v715
          %v745 = vadd.f32 %v740, %v743
          %v746 = vadd.f32 %v741, %v744
          %s747 = scalar_lea.vmem [#allocation2], 48
          %v748 = vld [vmem:[%s747] sm:$0xff]
          %v749 = vld [vmem:[%s747 + $0x8] sm:$0xff]
          %v750 = vmul.f32 %v748, 2.0
          %v751 = vmul.f32 %v749, 2.0
          %v752 = vadd.f32 %v745, %v750
          %v753 = vadd.f32 %v746, %v751
          %v754 = vstv %s700
          %v755 = vmul.f32 %v754, %v730
          %v756 = vmul.f32 %v754, %v731
          %v757 = vsub.f32 %v752, %v755
          %v758 = vsub.f32 %v753, %v756
          %v759 = vstv %s708
          %v760 = vmul.f32 %v759, %v716
          %v761 = vadd.f32 %v725, %v760
          %s762 = scalar_lea.vmem [#allocation3], 24
          %v763 = vld [vmem:[%s762] sm:$0xff]
          %v764 = vmul.f32 %v763, 2.0
          %v765 = vadd.f32 %v761, %v764
          %v766 = vstv %s706
          %v767 = vmul.f32 %v766, %v734
          %v768 = vsub.f32 %v765, %v767
          %v769 = vstv %s702
          %v770 = vmul.f32 %v769, %v757
          %v771 = vmul.f32 %v769, %v758
          %v772 = vsub.f32 %v714, %v770
          %v773 = vsub.f32 %v715, %v771
          %774 = vst [vmem:[%s479] sm:$0xff] %v772
          %775 = vst [vmem:[%s479 + $0x8] sm:$0xff] %v773
          %v776 = vstv %s710
          %v777 = vmul.f32 %v776, %v768
          %v778 = vsub.f32 %v716, %v777
          %779 = vst.msk [vmem:[%s487] sm:$0xff] %vm431, %v778
          %s780 = sadd.s32 %s454, 6
          %s781 = sld [smem:[#allocation4 + %s780]]
          %s782 = sadd.s32 %s454, 7
          %s783 = sld [smem:[#allocation4 + %s782]]
          %v784 = vld [vmem:[#allocation2] sm:$0xff]
          %v785 = vld [vmem:[#allocation2 + $0x8] sm:$0xff]
          %v786 = vld [vmem:[%s404] sm:$0xff]
          %v787 = vld [vmem:[%s404 + $0x8] sm:$0xff]
          %v788 = vmul.f32 %v786, 2.0
          %v789 = vmul.f32 %v787, 2.0
          %v790 = vld [vmem:[%s479] sm:$0xff]
          %v791 = vld [vmem:[%s479 + $0x8] sm:$0xff]
          %v792 = vld [vmem:[%s482] sm:$0xff]
          %v793 = vld [vmem:[%s482 + $0x8] sm:$0xff]
          %v794 = vadd.f32 %v790, %v792
          %v795 = vadd.f32 %v791, %v793
          %v796 = vsub.f32 %v788, %v794
          %v797 = vsub.f32 %v789, %v795
          %v798 = vstv %s781
          %v799 = vmul.f32 %v798, %v796
          %v800 = vmul.f32 %v798, %v797
          %v801 = vadd.f32 %v784, %v799
          %v802 = vadd.f32 %v785, %v800
          %803 = vst [vmem:[#allocation2] sm:$0xff] %v801
          %804 = vst [vmem:[#allocation2 + $0x8] sm:$0xff] %v802
          %v805 = vld [vmem:[#allocation3] sm:$0xff]
          %v806 = vld [vmem:[%s410] sm:$0xff]
          %v807 = vmul.f32 %v806, 2.0
          %v808 = vld [vmem:[%s487] sm:$0xff]
          %v809 = vld [vmem:[%s489] sm:$0xff]
          %v810 = vadd.f32 %v808, %v809
          %v811 = vsub.f32 %v807, %v810
          %v812 = vstv %s783
          %v813 = vmul.f32 %v812, %v811
          %v814 = vadd.f32 %v805, %v813
          %815 = vst.msk [vmem:[#allocation3] sm:$0xff] %vm431, %v814
          %s816 = sadd.s32 %s454, 14
          %s817 = sld [smem:[#allocation4 + %s816]]
          %s818 = sadd.s32 %s454, 15
          %s819 = sld [smem:[#allocation4 + %s818]]
          %v820 = vld [vmem:[%s666] sm:$0xff]
          %v821 = vld [vmem:[%s666 + $0x8] sm:$0xff]
          %v822 = vld [vmem:[%s482] sm:$0xff]
          %v823 = vld [vmem:[%s482 + $0x8] sm:$0xff]
          %v824 = vmul.f32 %v822, 2.0
          %v825 = vmul.f32 %v823, 2.0
          %v826 = vld [vmem:[%s404] sm:$0xff]
          %v827 = vld [vmem:[%s404 + $0x8] sm:$0xff]
          %v828 = vld [vmem:[%s550] sm:$0xff]
          %v829 = vld [vmem:[%s550 + $0x8] sm:$0xff]
          %v830 = vadd.f32 %v826, %v828
          %v831 = vadd.f32 %v827, %v829
          %v832 = vsub.f32 %v824, %v830
          %v833 = vsub.f32 %v825, %v831
          %v834 = vstv %s817
          %v835 = vmul.f32 %v834, %v832
          %v836 = vmul.f32 %v834, %v833
          %v837 = vadd.f32 %v820, %v835
          %v838 = vadd.f32 %v821, %v836
          %839 = vst [vmem:[%s666] sm:$0xff] %v837
          %840 = vst [vmem:[%s666 + $0x8] sm:$0xff] %v838
          %v841 = vld [vmem:[%s681] sm:$0xff]
          %v842 = vld [vmem:[%s489] sm:$0xff]
          %v843 = vmul.f32 %v842, 2.0
          %v844 = vld [vmem:[%s410] sm:$0xff]
          %v845 = vld [vmem:[%s553] sm:$0xff]
          %v846 = vadd.f32 %v844, %v845
          %v847 = vsub.f32 %v843, %v846
          %v848 = vstv %s819
          %v849 = vmul.f32 %v848, %v847
          %v850 = vadd.f32 %v841, %v849
          %851 = vst.msk [vmem:[%s681] sm:$0xff] %vm431, %v850
          %s852 = sadd.s32 %s454, 22
          %s853 = sld [smem:[#allocation4 + %s852]]
          %s854 = sadd.s32 %s454, 23
          %s855 = sld [smem:[#allocation4 + %s854]]
          %v856 = vld [vmem:[%s585] sm:$0xff]
          %v857 = vld [vmem:[%s585 + $0x8] sm:$0xff]
          %v858 = vld [vmem:[%s550] sm:$0xff]
          %v859 = vld [vmem:[%s550 + $0x8] sm:$0xff]
          %v860 = vmul.f32 %v858, 2.0
          %v861 = vmul.f32 %v859, 2.0
          %v862 = vld [vmem:[%s482] sm:$0xff]
          %v863 = vld [vmem:[%s482 + $0x8] sm:$0xff]
          %v864 = vld [vmem:[%s479] sm:$0xff]
          %v865 = vld [vmem:[%s479 + $0x8] sm:$0xff]
          %v866 = vadd.f32 %v862, %v864
          %v867 = vadd.f32 %v863, %v865
          %v868 = vsub.f32 %v860, %v866
          %v869 = vsub.f32 %v861, %v867
          %v870 = vstv %s853
          %v871 = vmul.f32 %v870, %v868
          %v872 = vmul.f32 %v870, %v869
          %v873 = vadd.f32 %v856, %v871
          %v874 = vadd.f32 %v857, %v872
          %875 = vst [vmem:[%s585] sm:$0xff] %v873
          %876 = vst [vmem:[%s585 + $0x8] sm:$0xff] %v874
          %v877 = vld [vmem:[%s600] sm:$0xff]
          %v878 = vld [vmem:[%s553] sm:$0xff]
          %v879 = vmul.f32 %v878, 2.0
          %v880 = vld [vmem:[%s489] sm:$0xff]
          %v881 = vld [vmem:[%s487] sm:$0xff]
          %v882 = vadd.f32 %v880, %v881
          %v883 = vsub.f32 %v879, %v882
          %v884 = vstv %s855
          %v885 = vmul.f32 %v884, %v883
          %v886 = vadd.f32 %v877, %v885
          %887 = vst.msk [vmem:[%s600] sm:$0xff] %vm431, %v886
          %s888 = sadd.s32 %s454, 30
          %s889 = sld [smem:[#allocation4 + %s888]]
          %s890 = sadd.s32 %s454, 31
          %s891 = sld [smem:[#allocation4 + %s890]]
          %v892 = vld [vmem:[%s747] sm:$0xff]
          %v893 = vld [vmem:[%s747 + $0x8] sm:$0xff]
          %v894 = vld [vmem:[%s479] sm:$0xff]
          %v895 = vld [vmem:[%s479 + $0x8] sm:$0xff]
          %v896 = vmul.f32 %v894, 2.0
          %v897 = vmul.f32 %v895, 2.0
          %v898 = vld [vmem:[%s550] sm:$0xff]
          %v899 = vld [vmem:[%s550 + $0x8] sm:$0xff]
          %v900 = vld [vmem:[%s404] sm:$0xff]
          %v901 = vld [vmem:[%s404 + $0x8] sm:$0xff]
          %v902 = vadd.f32 %v898, %v900
          %v903 = vadd.f32 %v899, %v901
          %v904 = vsub.f32 %v896, %v902
          %v905 = vsub.f32 %v897, %v903
          %v906 = vstv %s889
          %v907 = vmul.f32 %v906, %v904
          %v908 = vmul.f32 %v906, %v905
          %v909 = vadd.f32 %v892, %v907
          %v910 = vadd.f32 %v893, %v908
          %911 = vst [vmem:[%s747] sm:$0xff] %v909
          %912 = vst [vmem:[%s747 + $0x8] sm:$0xff] %v910
          %v913 = vld [vmem:[%s762] sm:$0xff]
          %v914 = vld [vmem:[%s487] sm:$0xff]
          %v915 = vmul.f32 %v914, 2.0
          %v916 = vld [vmem:[%s553] sm:$0xff]
          %v917 = vld [vmem:[%s410] sm:$0xff]
          %v918 = vadd.f32 %v916, %v917
          %v919 = vsub.f32 %v915, %v918
          %v920 = vstv %s891
          %v921 = vmul.f32 %v920, %v919
          %v922 = vadd.f32 %v913, %v921
          %923 = vst.msk [vmem:[%s762] sm:$0xff] %vm431, %v922
        $region145: #{tpu_custom_call.1} parent=122 // loop_footer
          %s453 = sadd.s32 1, %s449
        $region146: #{tpu_custom_call.1} parent=122 // loop_footer_branch
          %448 = sbr.rel target = $region142
        $region147: #{tpu_custom_call.1} parent=122 // loop_exit
          _
        %s924 = sand.u32 %s129, 1
        %s925 = scalar_lea.sflag [#allocation5], %s924
        %s926 = sand.u32 %s129, 1
        %s927 = smul.addr %s926, 64
        %s928 = scalar_lea.vmem [#allocation10], %s927
        %s929 = sand.u32 %s155, 1
        %s930 = sand.u32 %s155, 1
        %s931 = smul.addr %s930, 32
        %s932 = scalar_lea.vmem [#allocation11], %s931
        // Predicated region
        $region148: #{tpu_custom_call.1} parent=122 // pred_check
          %p933 = pneg %p139
        $region149: #{tpu_custom_call.1} parent=122 // pred_check_branch
          %935 = sbr.rel (%p933) target = $region151
        $region150: #{tpu_custom_call.1} parent=122 // pred_region
          %s937 = ssub.s32 1024, 1024
          %938 = vsyncadd %s925, %s937
          %s939 = smul.addr %s22, 2
          %s940 = smul.addr %s939, 128
          %s941 = scalar_lea.hbm %s5, %s940
          %s942 = sshll.u32 %s928, 4
          %s943 = int_to_ptr.vmem [resolvable:$true] %s942
          %948 = dma.vmem_to_hbm [thread:$0]  %s943, 1024, %s941, %s925, 256, 512, 16
        $region151: #{tpu_custom_call.1} parent=122 // pred_fallthru
          _
        // Predicated region
        $region152: #{tpu_custom_call.1} parent=122 // pred_check
          %p949 = pneg %p165
        $region153: #{tpu_custom_call.1} parent=122 // pred_check_branch
          %951 = sbr.rel (%p949) target = $region155
        $region154: #{tpu_custom_call.1} parent=122 // pred_region
          %s952 = smul.addr %s22, 8
          %s953 = scalar_lea.vmem %s6, %s952
          // Predicated region
          $region156: #{tpu_custom_call.1} parent=154 // pred_check
            _
          $region157: #{tpu_custom_call.1} parent=154 // pred_check_branch
            %955 = sbr.rel (0) target = $region159
          $region158: #{tpu_custom_call.1} parent=154 // pred_region
            // Predicated region
            $region160: #{tpu_custom_call.1} parent=158 // pred_check
              _
            $region161: #{tpu_custom_call.1} parent=158 // pred_check_branch
              %957 = sbr.rel (0) target = $region163
            $region162: #{tpu_custom_call.1} parent=158 // pred_region
              // Predicated region
              $region175: #{tpu_custom_call.1} parent=162 // pred_check
                _
              $region176: #{tpu_custom_call.1} parent=162 // pred_check_branch
                %978 = sbr.rel (0) target = $region178
              $region177: #{tpu_custom_call.1} parent=162 // pred_region
                loop: start=0, step=1, limit=1
                $region179: #{tpu_custom_call.1} parent=177 // loop_pre_header
                  _
                $region180: #{tpu_custom_call.1} parent=177 // loop_header
                  %s980 = sphi 0, %s984
                  %p981 = scmp.ge.s32.totalorder %s980, 1
                  %s985 = sphi %s932, %s932
                  %s986 = sphi %s953, %s953
                $region181: #{tpu_custom_call.1} parent=177 // loop_header_branch
                  %983 = sbr.rel (%p981) target = $region185
                $region182: #{tpu_custom_call.1} parent=177 // loop_body
                  %v987 = vld [vmem:[%s985] sm:$0xff]
                  %988 = vst [vmem:[%s986] sm:$0xff] %v987
                  %v989 = vld [vmem:[%s985 + $0x8] sm:$0xff]
                  %990 = vst [vmem:[%s986 + $0x10] sm:$0xff] %v989
                  %v991 = vld [vmem:[%s985 + $0x10] sm:$0xff]
                  %992 = vst [vmem:[%s986 + $0x20] sm:$0xff] %v991
                  %v993 = vld [vmem:[%s985 + $0x18] sm:$0xff]
                  %994 = vst [vmem:[%s986 + $0x30] sm:$0xff] %v993
                $region183: #{tpu_custom_call.1} parent=177 // loop_footer
                  %s984 = sadd.s32 1, %s980
                $region184: #{tpu_custom_call.1} parent=177 // loop_footer_branch
                  %979 = sbr.rel target = $region180
                $region185: #{tpu_custom_call.1} parent=177 // loop_exit
                  _
              $region178: #{tpu_custom_call.1} parent=162 // pred_fallthru
                _
              // Predicated region
              $region186: #{tpu_custom_call.1} parent=162 // pred_check
                _
              $region187: #{tpu_custom_call.1} parent=162 // pred_check_branch
                %996 = sbr.rel target = $region189
              $region188: #{tpu_custom_call.1} parent=162 // pred_region
                _
              $region189: #{tpu_custom_call.1} parent=162 // pred_fallthru
                _
            $region163: #{tpu_custom_call.1} parent=158 // pred_fallthru
              _
            // Predicated region
            $region164: #{tpu_custom_call.1} parent=158 // pred_check
              _
            $region165: #{tpu_custom_call.1} parent=158 // pred_check_branch
              %959 = sbr.rel target = $region167
            $region166: #{tpu_custom_call.1} parent=158 // pred_region
              loop: start=0, step=1, limit=1
              $region168: #{tpu_custom_call.1} parent=166 // loop_pre_header
                _
              $region169: #{tpu_custom_call.1} parent=166 // loop_header
                %s962 = sphi 0, %s966
                %p963 = scmp.ge.s32.totalorder %s962, 1
                %s967 = sphi %s932, %s932
                %s968 = sphi %s953, %s953
              $region170: #{tpu_custom_call.1} parent=166 // loop_header_branch
                %965 = sbr.rel (%p963) target = $region174
              $region171: #{tpu_custom_call.1} parent=166 // loop_body
                %v969 = vld [vmem:[%s967] sm:$0xff]
                %970 = vst [vmem:[%s968] sm:$0xff] %v969
                %v971 = vld [vmem:[%s967 + $0x8] sm:$0xff]
                %972 = vst [vmem:[%s968 + $0x10] sm:$0xff] %v971
                %v973 = vld [vmem:[%s967 + $0x10] sm:$0xff]
                %974 = vst [vmem:[%s968 + $0x20] sm:$0xff] %v973
                %v975 = vld [vmem:[%s967 + $0x18] sm:$0xff]
                %976 = vst [vmem:[%s968 + $0x30] sm:$0xff] %v975
              $region172: #{tpu_custom_call.1} parent=166 // loop_footer
                %s966 = sadd.s32 1, %s962
              $region173: #{tpu_custom_call.1} parent=166 // loop_footer_branch
                %961 = sbr.rel target = $region169
              $region174: #{tpu_custom_call.1} parent=166 // loop_exit
                _
            $region167: #{tpu_custom_call.1} parent=158 // pred_fallthru
              _
          $region159: #{tpu_custom_call.1} parent=154 // pred_fallthru
            _
          %997 = vnop
        $region155: #{tpu_custom_call.1} parent=122 // pred_fallthru
          _
      $region123: #{tpu_custom_call.1} parent=5 // pred_fallthru
        _
      %p998 = scmp.le.s32.totalorder 2, %s17
      // Predicated region
      $region190: #{tpu_custom_call.1} parent=5 // pred_check
        %p999 = pneg %p998
      $region191: #{tpu_custom_call.1} parent=5 // pred_check_branch
        %1001 = sbr.rel (%p999) target = $region193
      $region192: #{tpu_custom_call.1} parent=5 // pred_region
        %s1002 = ssub.s32 %s17, 2
        // Predicated region
        $region194: #{tpu_custom_call.1} parent=192 // pred_check
          %p1003 = pneg %p145
        $region195: #{tpu_custom_call.1} parent=192 // pred_check_branch
          %1005 = sbr.rel (%p1003) target = $region197
        $region196: #{tpu_custom_call.1} parent=192 // pred_region
          %s1006 = sand.u32 %s130, 1
          %s1007 = scalar_lea.sflag [#allocation5], %s1006
          %s1008 = sand.u32 %s130, 1
          %s1009 = smul.addr %s1008, 64
          %s1010 = scalar_lea.vmem [#allocation10], %s1009
          %1011 = dma.done %s1007, 1024
        $region197: #{tpu_custom_call.1} parent=192 // pred_fallthru
          _
        // Predicated region
        $region198: #{tpu_custom_call.1} parent=192 // pred_check
          %p1012 = pneg %p171
        $region199: #{tpu_custom_call.1} parent=192 // pred_check_branch
          %1014 = sbr.rel (%p1012) target = $region201
        $region200: #{tpu_custom_call.1} parent=192 // pred_region
          %s1015 = sand.u32 %s156, 1
          %s1016 = sand.u32 %s156, 1
          %s1017 = smul.addr %s1016, 32
          %s1018 = scalar_lea.vmem [#allocation11], %s1017
        $region201: #{tpu_custom_call.1} parent=192 // pred_fallthru
          _
      $region193: #{tpu_custom_call.1} parent=5 // pred_fallthru
        _
    $region6: #{tpu_custom_call.1} parent=1 // loop_footer
      %s21 = sadd.s32 1, %s17
    $region7: #{tpu_custom_call.1} parent=1 // loop_footer_branch
      %16 = sbr.rel target = $region3
    $region8: #{tpu_custom_call.1} parent=1 // loop_exit
      _
    %1019 = vsyncpa [#allocation5], 1
    %s1020 = scalar_lea.sflag [#allocation5], 1
    %1021 = vsyncpa %s1020, 1
    %1022 = vsyncpa [#allocation6], 1
    %s1023 = scalar_lea.sflag [#allocation6], 1
    %1024 = vsyncpa %s1023, 1

</llo_original>
